<compile_context>
chip_gen: v6e
topology: v6e:2x2x1
jax: 0.10.0
libtpu: 0.0.40
codegen_flags: <defaults>
</compile_context>

<pallas_src>
from functools import partial

import jax
import jax.numpy as jnp
from jax.experimental import pallas as pl
from jax.experimental.pallas import tpu as pltpu


def residual_kernel(x_ref, w9_ref, w1_ref, o_ref, xr_ref, *, W):
    # x_ref : (Cin, Lpad)   flattened, zero-padded input (one batch element)
    # w9_ref: (9, Crh, Cin) per-tap 3x3-conv weights, tap index = 3*dy + dx
    # w1_ref: (Cout, Crh)   1x1-conv weights (transposed)
    # o_ref : (Cout, H*Wp)  padded-width output (2 garbage cols per row,
    #                       cropped once in the wrapper)
    # xr_ref: (Cin, Lpad)   VMEM scratch: ReLU(x), computed once per step
    Wp = W + 2
    M = o_ref.shape[1]          # H * Wp "pixel" columns
    Crh = w9_ref.shape[1]

    # Single ReLU pass over the whole slab (taps re-slice this scratch).
    xr_ref[...] = jnp.maximum(x_ref[...], 0.0)

    acc = jnp.zeros((Crh, M), dtype=jnp.float32)
    for dy in range(3):
        for dx in range(3):
            off = dy * Wp + dx
            # Contiguous lane-offset slice of the ReLU'd slab; K = Cin matmul.
            acc = acc + jnp.dot(
                w9_ref[3 * dy + dx],
                xr_ref[:, off:off + M],
                preferred_element_type=jnp.float32)               # (Crh, M)

    hidden = jnp.maximum(acc, 0.0)
    y = jnp.dot(w1_ref[...], hidden,
                preferred_element_type=jnp.float32)               # (Cout, M)

    # Residual: original (un-ReLU'd) input; the centre of the 3x3 window sits
    # at flat lane offset Wp + 1.  Cin == Cout by construction.
    x_res = x_ref[:, Wp + 1:Wp + 1 + M]
    o_ref[...] = (y + x_res).astype(o_ref.dtype)


def residual_forward(x_nchw, w3_hwio, w1_io):
    """x_nchw: (N, Cin, H, W) float32. Returns (N, Cout, H, W)."""
    N, Cin, H, W = x_nchw.shape
    Crh = w3_hwio.shape[3]
    Cout = w1_io.shape[1]
    assert Cin == Cout, "residual add requires in_channels == num_hiddens"

    Wp = W + 2
    M = H * Wp
    # 1 top + 2 bottom pad rows so every tap slice of length M stays in bounds
    # (largest tap offset is 2*Wp + 2).
    Lpad = (H + 3) * Wp

    # Zero-pad spatially and flatten (H, W); stays channel-major (NCHW-native).
    x_pad = jnp.pad(x_nchw, ((0, 0), (0, 0), (1, 2), (1, 1)))
    x_flat = x_pad.reshape(N, Cin, Lpad)

    # Weight slabs: w3 (kh, kw, i, o) -> (9, Crh, Cin); w1 -> (Cout, Crh).
    w9 = jnp.transpose(w3_hwio, (0, 1, 3, 2)).reshape(9, Crh, Cin)
    w1_t = jnp.transpose(w1_io, (1, 0))

    out_flat = pl.pallas_call(
        partial(residual_kernel, W=W),
        out_shape=jax.ShapeDtypeStruct((N, Cout, M), jnp.float32),
        grid_spec=pltpu.PrefetchScalarGridSpec(
            num_scalar_prefetch=0,
            grid=(N,),
            in_specs=[
                pl.BlockSpec((None, Cin, Lpad), lambda b: (b, 0, 0)),
                pl.BlockSpec((9, Crh, Cin), lambda b: (0, 0, 0)),
                pl.BlockSpec((Cout, Crh), lambda b: (0, 0)),
            ],
            out_specs=pl.BlockSpec((None, Cout, M), lambda b: (b, 0, 0)),
            scratch_shapes=[pltpu.VMEM((Cin, Lpad), jnp.float32)],
        ),
        compiler_params=pltpu.CompilerParams(
            dimension_semantics=("parallel",),
        ),
    )(x_flat, w9, w1_t)

    # Crop the 2 garbage columns per image row: (N, Cout, H*Wp) -> (N, Cout, H, W).
    return out_flat.reshape(N, Cout, H, Wp)[:, :, :, :W]


def residual_reference(x_nchw, w3_hwio, w1_io):
    """Pure-JAX reference matching the PyTorch module semantics."""
    h = jnp.maximum(x_nchw, 0.0)
    h = jax.lax.conv_general_dilated(
        h, w3_hwio, window_strides=(1, 1), padding="SAME",
        dimension_numbers=("NCHW", "HWIO", "NCHW"))
    h = jnp.maximum(h, 0.0)
    h = jnp.einsum("nchw,co->nohw", h, w1_io)
    return x_nchw + h


if __name__ == "__main__":
    # Module hyperparams (in_channels == num_hiddens so the residual add is valid).
    in_channels = 32
    num_hiddens = 32
    num_residual_hiddens = 16
    N, H, W = 2, 16, 16

    key = jax.random.PRNGKey(0)
    kx, kw3, kw1 = jax.random.split(key, 3)

    x = jax.random.normal(kx, (N, in_channels, H, W), dtype=jnp.float32)
    # Conv weights in HWIO layout, deterministic init, small scale.
    w3 = 0.1 * jax.random.normal(
        kw3, (3, 3, in_channels, num_residual_hiddens), dtype=jnp.float32)
    w1 = 0.1 * jax.random.normal(
        kw1, (num_residual_hiddens, num_hiddens), dtype=jnp.float32)

    out = residual_forward(x, w3, w1)
    out = jax.block_until_ready(out)

    ref = residual_reference(x, w3, w1)
    assert out.shape == (N, num_hiddens, H, W)
    assert jnp.allclose(out, ref, atol=2e-4, rtol=2e-4), "mismatch vs reference"

    print("KERNEL_OK")
</pallas_src>

<mosaic_0001>
module attributes {stable_mosaic.version = 11 : i64} {
  func.func @residual_kernel(%arg0: i32, %arg1: memref<1x32x342xf32, #tpu.memory_space<vmem>>, %arg2: memref<9x16x32xf32, #tpu.memory_space<vmem>>, %arg3: memref<32x16xf32, #tpu.memory_space<vmem>>, %arg4: memref<1x32x288xf32, #tpu.memory_space<vmem>>, %arg5: memref<32x342xf32, #tpu.memory_space<vmem>>) attributes {dimension_semantics = [#tpu.dimension_semantics<parallel>], iteration_bounds = array<i64: 2>, scalar_prefetch = 0 : i64, scratch_operands = 1 : i64, tpu.core_type = #tpu.core_type<tc>, window_params = [{transform_indices = @transform_0, window_bounds = array<i64: 1, 32, 342>}, {pipeline_mode = #tpu.pipeline_mode<synchronous>, transform_indices = @transform_1, window_bounds = array<i64: 9, 16, 32>}, {pipeline_mode = #tpu.pipeline_mode<synchronous>, transform_indices = @transform_2, window_bounds = array<i64: 32, 16>}, {transform_indices = @transform_3, window_bounds = array<i64: 1, 32, 288>}]} {
    %c0 = arith.constant 0 : index
    %c0_0 = arith.constant 0 : index
    %c0_1 = arith.constant 0 : index
    %0 = vector.load %arg1[%c0, %c0_0, %c0_1] : memref<1x32x342xf32, #tpu.memory_space<vmem>>, vector<1x32x342xf32>
    %1 = vector.shape_cast %0 : vector<1x32x342xf32> to vector<32x342xf32>
    %cst = arith.constant 0.000000e+00 : f32
    %2 = vector.broadcast %cst : f32 to vector<32x342xf32>
    %3 = arith.maximumf %1, %2 : vector<32x342xf32>
    %c0_2 = arith.constant 0 : index
    %c0_3 = arith.constant 0 : index
    %4 = vector.load %arg5[%c0_2, %c0_3] : memref<32x342xf32, #tpu.memory_space<vmem>>, vector<32x342xf32>
    tpu.vector_store %arg5[%c0_2, %c0_3], %3 {strides = array<i32>} : memref<32x342xf32, #tpu.memory_space<vmem>>, vector<32x342xf32>,
    %cst_4 = arith.constant 0.000000e+00 : f32
    %5 = vector.broadcast %cst_4 : f32 to vector<16x288xf32>
    %c0_5 = arith.constant 0 : index
    %c0_6 = arith.constant 0 : index
    %c0_7 = arith.constant 0 : index
    %6 = vector.load %arg2[%c0_5, %c0_6, %c0_7] : memref<9x16x32xf32, #tpu.memory_space<vmem>>, vector<1x16x32xf32>
    %7 = vector.shape_cast %6 : vector<1x16x32xf32> to vector<16x32xf32>
    %c0_8 = arith.constant 0 : index
    %c0_9 = arith.constant 0 : index
    %8 = vector.load %arg5[%c0_8, %c0_9] : memref<32x342xf32, #tpu.memory_space<vmem>>, vector<32x288xf32>
    %cst_10 = arith.constant dense<0.000000e+00> : vector<16x288xf32>
    %9 = tpu.matmul %7, %8, %cst_10 {dimension_numbers = #tpu.dot_dimension_numbers<[1], [0], [0], [1], [0, 0, 1, 1], [], []>} : vector<16x32xf32>, vector<32x288xf32>, vector<16x288xf32> -> vector<16x288xf32>
    %10 = arith.addf %5, %9 : vector<16x288xf32>
    %c1 = arith.constant 1 : index
    %c0_11 = arith.constant 0 : index
    %c0_12 = arith.constant 0 : index
    %11 = vector.load %arg2[%c1, %c0_11, %c0_12] : memref<9x16x32xf32, #tpu.memory_space<vmem>>, vector<1x16x32xf32>
    %12 = vector.shape_cast %11 : vector<1x16x32xf32> to vector<16x32xf32>
    %c0_13 = arith.constant 0 : index
    %c1_14 = arith.constant 1 : index
    %13 = vector.load %arg5[%c0_13, %c1_14] : memref<32x342xf32, #tpu.memory_space<vmem>>, vector<32x288xf32>
    %cst_15 = arith.constant dense<0.000000e+00> : vector<16x288xf32>
    %14 = tpu.matmul %12, %13, %cst_15 {dimension_numbers = #tpu.dot_dimension_numbers<[1], [0], [0], [1], [0, 0, 1, 1], [], []>} : vector<16x32xf32>, vector<32x288xf32>, vector<16x288xf32> -> vector<16x288xf32>
    %15 = arith.addf %10, %14 : vector<16x288xf32>
    %c2 = arith.constant 2 : index
    %c0_16 = arith.constant 0 : index
    %c0_17 = arith.constant 0 : index
    %16 = vector.load %arg2[%c2, %c0_16, %c0_17] : memref<9x16x32xf32, #tpu.memory_space<vmem>>, vector<1x16x32xf32>
    %17 = vector.shape_cast %16 : vector<1x16x32xf32> to vector<16x32xf32>
    %c0_18 = arith.constant 0 : index
    %c2_19 = arith.constant 2 : index
    %18 = vector.load %arg5[%c0_18, %c2_19] : memref<32x342xf32, #tpu.memory_space<vmem>>, vector<32x288xf32>
    %cst_20 = arith.constant dense<0.000000e+00> : vector<16x288xf32>
    %19 = tpu.matmul %17, %18, %cst_20 {dimension_numbers = #tpu.dot_dimension_numbers<[1], [0], [0], [1], [0, 0, 1, 1], [], []>} : vector<16x32xf32>, vector<32x288xf32>, vector<16x288xf32> -> vector<16x288xf32>
    %20 = arith.addf %15, %19 : vector<16x288xf32>
    %c3 = arith.constant 3 : index
    %c0_21 = arith.constant 0 : index
    %c0_22 = arith.constant 0 : index
    %21 = vector.load %arg2[%c3, %c0_21, %c0_22] : memref<9x16x32xf32, #tpu.memory_space<vmem>>, vector<1x16x32xf32>
    %22 = vector.shape_cast %21 : vector<1x16x32xf32> to vector<16x32xf32>
    %c0_23 = arith.constant 0 : index
    %c18 = arith.constant 18 : index
    %23 = vector.load %arg5[%c0_23, %c18] : memref<32x342xf32, #tpu.memory_space<vmem>>, vector<32x288xf32>
    %cst_24 = arith.constant dense<0.000000e+00> : vector<16x288xf32>
    %24 = tpu.matmul %22, %23, %cst_24 {dimension_numbers = #tpu.dot_dimension_numbers<[1], [0], [0], [1], [0, 0, 1, 1], [], []>} : vector<16x32xf32>, vector<32x288xf32>, vector<16x288xf32> -> vector<16x288xf32>
    %25 = arith.addf %20, %24 : vector<16x288xf32>
    %c4 = arith.constant 4 : index
    %c0_25 = arith.constant 0 : index
    %c0_26 = arith.constant 0 : index
    %26 = vector.load %arg2[%c4, %c0_25, %c0_26] : memref<9x16x32xf32, #tpu.memory_space<vmem>>, vector<1x16x32xf32>
    %27 = vector.shape_cast %26 : vector<1x16x32xf32> to vector<16x32xf32>
    %c0_27 = arith.constant 0 : index
    %c19 = arith.constant 19 : index
    %28 = vector.load %arg5[%c0_27, %c19] : memref<32x342xf32, #tpu.memory_space<vmem>>, vector<32x288xf32>
    %cst_28 = arith.constant dense<0.000000e+00> : vector<16x288xf32>
    %29 = tpu.matmul %27, %28, %cst_28 {dimension_numbers = #tpu.dot_dimension_numbers<[1], [0], [0], [1], [0, 0, 1, 1], [], []>} : vector<16x32xf32>, vector<32x288xf32>, vector<16x288xf32> -> vector<16x288xf32>
    %30 = arith.addf %25, %29 : vector<16x288xf32>
    %c5 = arith.constant 5 : index
    %c0_29 = arith.constant 0 : index
    %c0_30 = arith.constant 0 : index
    %31 = vector.load %arg2[%c5, %c0_29, %c0_30] : memref<9x16x32xf32, #tpu.memory_space<vmem>>, vector<1x16x32xf32>
    %32 = vector.shape_cast %31 : vector<1x16x32xf32> to vector<16x32xf32>
    %c0_31 = arith.constant 0 : index
    %c20 = arith.constant 20 : index
    %33 = vector.load %arg5[%c0_31, %c20] : memref<32x342xf32, #tpu.memory_space<vmem>>, vector<32x288xf32>
    %cst_32 = arith.constant dense<0.000000e+00> : vector<16x288xf32>
    %34 = tpu.matmul %32, %33, %cst_32 {dimension_numbers = #tpu.dot_dimension_numbers<[1], [0], [0], [1], [0, 0, 1, 1], [], []>} : vector<16x32xf32>, vector<32x288xf32>, vector<16x288xf32> -> vector<16x288xf32>
    %35 = arith.addf %30, %34 : vector<16x288xf32>
    %c6 = arith.constant 6 : index
    %c0_33 = arith.constant 0 : index
    %c0_34 = arith.constant 0 : index
    %36 = vector.load %arg2[%c6, %c0_33, %c0_34] : memref<9x16x32xf32, #tpu.memory_space<vmem>>, vector<1x16x32xf32>
    %37 = vector.shape_cast %36 : vector<1x16x32xf32> to vector<16x32xf32>
    %c0_35 = arith.constant 0 : index
    %c36 = arith.constant 36 : index
    %38 = vector.load %arg5[%c0_35, %c36] : memref<32x342xf32, #tpu.memory_space<vmem>>, vector<32x288xf32>
    %cst_36 = arith.constant dense<0.000000e+00> : vector<16x288xf32>
    %39 = tpu.matmul %37, %38, %cst_36 {dimension_numbers = #tpu.dot_dimension_numbers<[1], [0], [0], [1], [0, 0, 1, 1], [], []>} : vector<16x32xf32>, vector<32x288xf32>, vector<16x288xf32> -> vector<16x288xf32>
    %40 = arith.addf %35, %39 : vector<16x288xf32>
    %c7 = arith.constant 7 : index
    %c0_37 = arith.constant 0 : index
    %c0_38 = arith.constant 0 : index
    %41 = vector.load %arg2[%c7, %c0_37, %c0_38] : memref<9x16x32xf32, #tpu.memory_space<vmem>>, vector<1x16x32xf32>
    %42 = vector.shape_cast %41 : vector<1x16x32xf32> to vector<16x32xf32>
    %c0_39 = arith.constant 0 : index
    %c37 = arith.constant 37 : index
    %43 = vector.load %arg5[%c0_39, %c37] : memref<32x342xf32, #tpu.memory_space<vmem>>, vector<32x288xf32>
    %cst_40 = arith.constant dense<0.000000e+00> : vector<16x288xf32>
    %44 = tpu.matmul %42, %43, %cst_40 {dimension_numbers = #tpu.dot_dimension_numbers<[1], [0], [0], [1], [0, 0, 1, 1], [], []>} : vector<16x32xf32>, vector<32x288xf32>, vector<16x288xf32> -> vector<16x288xf32>
    %45 = arith.addf %40, %44 : vector<16x288xf32>
    %c8 = arith.constant 8 : index
    %c0_41 = arith.constant 0 : index
    %c0_42 = arith.constant 0 : index
    %46 = vector.load %arg2[%c8, %c0_41, %c0_42] : memref<9x16x32xf32, #tpu.memory_space<vmem>>, vector<1x16x32xf32>
    %47 = vector.shape_cast %46 : vector<1x16x32xf32> to vector<16x32xf32>
    %c0_43 = arith.constant 0 : index
    %c38 = arith.constant 38 : index
    %48 = vector.load %arg5[%c0_43, %c38] : memref<32x342xf32, #tpu.memory_space<vmem>>, vector<32x288xf32>
    %cst_44 = arith.constant dense<0.000000e+00> : vector<16x288xf32>
    %49 = tpu.matmul %47, %48, %cst_44 {dimension_numbers = #tpu.dot_dimension_numbers<[1], [0], [0], [1], [0, 0, 1, 1], [], []>} : vector<16x32xf32>, vector<32x288xf32>, vector<16x288xf32> -> vector<16x288xf32>
    %50 = arith.addf %45, %49 : vector<16x288xf32>
    %cst_45 = arith.constant 0.000000e+00 : f32
    %51 = vector.broadcast %cst_45 : f32 to vector<16x288xf32>
    %52 = arith.maximumf %50, %51 : vector<16x288xf32>
    %c0_46 = arith.constant 0 : index
    %c0_47 = arith.constant 0 : index
    %53 = vector.load %arg3[%c0_46, %c0_47] : memref<32x16xf32, #tpu.memory_space<vmem>>, vector<32x16xf32>
    %cst_48 = arith.constant dense<0.000000e+00> : vector<32x288xf32>
    %54 = tpu.matmul %53, %52, %cst_48 {dimension_numbers = #tpu.dot_dimension_numbers<[1], [0], [0], [1], [0, 0, 1, 1], [], []>} : vector<32x16xf32>, vector<16x288xf32>, vector<32x288xf32> -> vector<32x288xf32>
    %c0_49 = arith.constant 0 : index
    %c0_50 = arith.constant 0 : index
    %c19_51 = arith.constant 19 : index
    %55 = vector.load %arg1[%c0_49, %c0_50, %c19_51] : memref<1x32x342xf32, #tpu.memory_space<vmem>>, vector<1x32x288xf32>
    %56 = vector.shape_cast %55 : vector<1x32x288xf32> to vector<32x288xf32>
    %57 = arith.addf %54, %56 : vector<32x288xf32>
    %c0_52 = arith.constant 0 : index
    %c0_53 = arith.constant 0 : index
    %c0_54 = arith.constant 0 : index
    %58 = vector.load %arg4[%c0_52, %c0_53, %c0_54] : memref<1x32x288xf32, #tpu.memory_space<vmem>>, vector<1x32x288xf32>
    %59 = vector.shape_cast %58 : vector<1x32x288xf32> to vector<32x288xf32>
    %60 = vector.shape_cast %57 : vector<32x288xf32> to vector<1x32x288xf32>
    tpu.vector_store %arg4[%c0_52, %c0_53, %c0_54], %60 {strides = array<i32>} : memref<1x32x288xf32, #tpu.memory_space<vmem>>, vector<1x32x288xf32>,
    return
  }
  func.func @transform_0(%arg0: i32) -> (i32, i32, i32) {
    %c0_i32 = arith.constant 0 : i32
    %c0_i32_0 = arith.constant 0 : i32
    %c0_i32_1 = arith.constant 0 : i32
    return %arg0, %c0_i32, %c0_i32_0 : i32, i32, i32
  }
  func.func @transform_1(%arg0: i32) -> (i32, i32, i32) {
    %c0_i32 = arith.constant 0 : i32
    %c0_i32_0 = arith.constant 0 : i32
    %c0_i32_1 = arith.constant 0 : i32
    %c0_i32_2 = arith.constant 0 : i32
    return %c0_i32, %c0_i32_0, %c0_i32_1 : i32, i32, i32
  }
  func.func @transform_2(%arg0: i32) -> (i32, i32) {
    %c0_i32 = arith.constant 0 : i32
    %c0_i32_0 = arith.constant 0 : i32
    %c0_i32_1 = arith.constant 0 : i32
    return %c0_i32, %c0_i32_0 : i32, i32
  }
  func.func @transform_3(%arg0: i32) -> (i32, i32, i32) {
    %c0_i32 = arith.constant 0 : i32
    %c0_i32_0 = arith.constant 0 : i32
    %c0_i32_1 = arith.constant 0 : i32
    return %arg0, %c0_i32, %c0_i32_0 : i32, i32, i32
  }
}

</mosaic_0001>

<llo_original>
// kernel: tpu_custom_call.1
$region0: #{tpu_custom_call.1}
  #allocation0 [shape = 'u32[]', space=smem, size = 0x4, offset = 0x4, fixed_abs, tag = 'smem constant byte address 0x4 - core index']
  #allocation1 [shape = 'u32[144,128]{1,0:T(1,128)}', space=vmem, size = 0x12000, scoped, tag = 'internal scratch']
  #allocation2 [shape = 'f32[32,342]{1,0:T(8,128)}', space=vmem, size = 0xc000, scoped, tag = 'scratch operand']
  %s0 = inlined_call_operand.hbm [shape: f32[2,32,342], index: 0, kind: input, shape index: {}]
  %s1 = inlined_call_operand.hbm [shape: f32[9,16,32], index: 1, kind: input, shape index: {}]
  %s2 = inlined_call_operand.vmem [shape: f32[32,16], index: 2, kind: input, shape index: {}]
  %s3 = inlined_call_operand.hbm [shape: f32[2,32,288], index: 3, kind: output, shape index: {}]
  %s4 = sld [smem:[#allocation0]]
  $region53: #{tpu_custom_call.1} parent=0
    _
  %s6 = ssub.s32 1, %s4
  %s7 = scalar_select 0, %s6, %s4
  $region1: #{tpu_custom_call.1} parent=0
    #allocation3 [shape = 'u8[98304]{0}', space=vmem, size = 0x18000, scoped, tag = 'input window, operand 0']
    #allocation4 [shape = 's32[2]{0}', space=sflag, size = 0x8, scoped, tag = 'scoped memory for tpu_custom_call.1']
    #allocation5 [shape = 's32[2]{0}', space=sflag, size = 0x8, scoped, tag = 'scoped memory for tpu_custom_call.1']
    #allocation6 [shape = 'u8[73728]{0}', space=vmem, size = 0x12000, scoped, tag = 'input window, operand 1, single buffered']
    #allocation7 [shape = 's32[1]{0}', space=sflag, size = 0x4, scoped, tag = 'scoped memory for tpu_custom_call.1']
    #allocation8 [shape = 'u8[98304]{0}', space=vmem, size = 0x18000, scoped, tag = 'output window, operand 0']
    %8 = vsyncpa [#allocation4], 0
    %s9 = scalar_lea.sflag [#allocation4], 1
    %10 = vsyncpa %s9, 0
    %11 = vsyncpa [#allocation7], 0
    %12 = vsyncpa [#allocation5], 0
    %s13 = scalar_lea.sflag [#allocation5], 1
    %14 = vsyncpa %s13, 0
    loop: start=0, step=1, limit=4
    $region2: #{tpu_custom_call.1} parent=1 // loop_pre_header
      _
    $region3: #{tpu_custom_call.1} parent=1 // loop_header
      %s16 = sphi 0, %s20
      %p17 = scmp.ge.s32.totalorder %s16, 4
      %s26 = sphi 0, %s28
      %s29 = sphi 0, %s26
      %s30 = sphi 0, %s29
      %s46 = sphi 0, %s30
      %s50 = sphi 0, %s50
      %s52 = sphi 0, %s50
      %s53 = sphi 0, %s52
      %s67 = sphi 0, %s53
      %s71 = sphi 0, %s71
      %s73 = sphi 0, %s71
      %s74 = sphi 0, %s73
      %s88 = sphi 0, %s74
      %s94 = sphi 0, %s96
      %s97 = sphi 0, %s94
      %s98 = sphi 0, %s97
      %s114 = sphi 0, %s98
    $region4: #{tpu_custom_call.1} parent=1 // loop_header_branch
      %19 = sbr.rel (%p17) target = $region8
    $region5: #{tpu_custom_call.1} parent=1 // loop_body
      %s21 = ssub.s32 %s16, 1
      %s22 = ssub.s32 %s16, 2
      %s23 = sadd.s32 %s16, 1
      %s24 = ssub.s32 %s16, %s23
      %p25 = scmp.eq.s32.totalorder %s24, 0
      %s27 = sadd.s32 %s26, 1
      %s28 = scalar_select %p25, %s26, %s27
      %p31 = pneg %p25
      %p32 = scmp.eq.s32.totalorder %s16, 1
      %p33 = por %p31, %p32
      %p34 = scmp.ne.s32.totalorder %s26, %s29
      %p35 = scmp.eq.s32.totalorder %s16, 0
      %p36 = por %p34, %p35
      %p37 = scmp.ne.s32.totalorder %s26, %s29
      %p38 = scmp.eq.s32.totalorder %s21, 1
      %p39 = por %p37, %p38
      %p40 = scmp.ne.s32.totalorder %s29, %s30
      %p41 = scmp.eq.s32.totalorder %s21, 0
      %p42 = por %p40, %p41
      %p43 = scmp.ne.s32.totalorder %s29, %s30
      %p44 = scmp.eq.s32.totalorder %s22, 1
      %p45 = por %p43, %p44
      %p47 = scmp.ne.s32.totalorder %s30, %s46
      %p48 = scmp.eq.s32.totalorder %s22, 0
      %p49 = por %p47, %p48
      %s51 = sadd.s32 %s50, 1
      %p54 = scmp.eq.s32.totalorder %s16, 1
      %p55 = scmp.ne.s32.totalorder %s50, %s52
      %p56 = scmp.eq.s32.totalorder %s16, 0
      %p57 = por %p55, %p56
      %p58 = scmp.ne.s32.totalorder %s50, %s52
      %p59 = scmp.eq.s32.totalorder %s21, 1
      %p60 = por %p58, %p59
      %p61 = scmp.ne.s32.totalorder %s52, %s53
      %p62 = scmp.eq.s32.totalorder %s21, 0
      %p63 = por %p61, %p62
      %p64 = scmp.ne.s32.totalorder %s52, %s53
      %p65 = scmp.eq.s32.totalorder %s22, 1
      %p66 = por %p64, %p65
      %p68 = scmp.ne.s32.totalorder %s53, %s67
      %p69 = scmp.eq.s32.totalorder %s22, 0
      %p70 = por %p68, %p69
      %s72 = sadd.s32 %s71, 1
      %p75 = scmp.eq.s32.totalorder %s16, 1
      %p76 = scmp.ne.s32.totalorder %s71, %s73
      %p77 = scmp.eq.s32.totalorder %s16, 0
      %p78 = por %p76, %p77
      %p79 = scmp.ne.s32.totalorder %s71, %s73
      %p80 = scmp.eq.s32.totalorder %s21, 1
      %p81 = por %p79, %p80
      %p82 = scmp.ne.s32.totalorder %s73, %s74
      %p83 = scmp.eq.s32.totalorder %s21, 0
      %p84 = por %p82, %p83
      %p85 = scmp.ne.s32.totalorder %s73, %s74
      %p86 = scmp.eq.s32.totalorder %s22, 1
      %p87 = por %p85, %p86
      %p89 = scmp.ne.s32.totalorder %s74, %s88
      %p90 = scmp.eq.s32.totalorder %s22, 0
      %p91 = por %p89, %p90
      %s92 = ssub.s32 %s16, %s23
      %p93 = scmp.eq.s32.totalorder %s92, 0
      %s95 = sadd.s32 %s94, 1
      %s96 = scalar_select %p93, %s94, %s95
      %p99 = pneg %p93
      %p100 = scmp.eq.s32.totalorder %s16, 1
      %p101 = por %p99, %p100
      %p102 = scmp.ne.s32.totalorder %s94, %s97
      %p103 = scmp.eq.s32.totalorder %s16, 0
      %p104 = por %p102, %p103
      %p105 = scmp.ne.s32.totalorder %s94, %s97
      %p106 = scmp.eq.s32.totalorder %s21, 1
      %p107 = por %p105, %p106
      %p108 = scmp.ne.s32.totalorder %s97, %s98
      %p109 = scmp.eq.s32.totalorder %s21, 0
      %p110 = por %p108, %p109
      %p111 = scmp.ne.s32.totalorder %s97, %s98
      %p112 = scmp.eq.s32.totalorder %s22, 1
      %p113 = por %p111, %p112
      %p115 = scmp.ne.s32.totalorder %s98, %s114
      %p116 = scmp.eq.s32.totalorder %s22, 0
      %p117 = por %p115, %p116
      %p118 = scmp.le.s32.totalorder 1, %s16
      %p119 = scmp.lt.s32.totalorder %s16, 3
      %p120 = pnand %p118, %p119
      %p121 = pneg %p120
      // Predicated region
      $region9: #{tpu_custom_call.1} parent=5 // pred_check
        _
      $region10: #{tpu_custom_call.1} parent=5 // pred_check_branch
        %123 = sbr.rel (%p120) target = $region12
      $region11: #{tpu_custom_call.1} parent=5 // pred_region
        %s124 = ssub.s32 %s16, 1
        // Predicated region
        $region13: #{tpu_custom_call.1} parent=11 // pred_check
          %p125 = pneg %p63
        $region14: #{tpu_custom_call.1} parent=11 // pred_check_branch
          %127 = sbr.rel (%p125) target = $region16
        $region15: #{tpu_custom_call.1} parent=11 // pred_region
          %s129 = ssub.s32 2304, 2304
          %130 = vsyncadd [#allocation7], %s129
          %s131 = sshll.u32 [#allocation6], 4
          %s132 = int_to_ptr.vmem [resolvable:$true] %s131
          %137 = dma.hbm_to_vmem [thread:$0]  %s1, 2304, %s132, [#allocation7], 128, 128, 8
        $region16: #{tpu_custom_call.1} parent=11 // pred_fallthru
          _
        // Predicated region
        $region17: #{tpu_custom_call.1} parent=11 // pred_check
          %p138 = pneg %p84
        $region18: #{tpu_custom_call.1} parent=11 // pred_check_branch
          %140 = sbr.rel (%p138) target = $region20
        $region19: #{tpu_custom_call.1} parent=11 // pred_region
          _
        $region20: #{tpu_custom_call.1} parent=11 // pred_fallthru
          _
      $region12: #{tpu_custom_call.1} parent=5 // pred_fallthru
        _
      %p141 = scmp.lt.s32.totalorder %s16, 2
      // Predicated region
      $region21: #{tpu_custom_call.1} parent=5 // pred_check
        %p142 = pneg %p141
      $region22: #{tpu_custom_call.1} parent=5 // pred_check_branch
        %144 = sbr.rel (%p142) target = $region24
      $region23: #{tpu_custom_call.1} parent=5 // pred_region
        // Predicated region
        $region25: #{tpu_custom_call.1} parent=23 // pred_check
          %p145 = pneg %p36
        $region26: #{tpu_custom_call.1} parent=23 // pred_check_branch
          %147 = sbr.rel (%p145) target = $region28
        $region27: #{tpu_custom_call.1} parent=23 // pred_region
          %s148 = sand.u32 %s26, 1
          %s149 = scalar_lea.sflag [#allocation4], %s148
          %s150 = sand.u32 %s26, 1
          %s151 = smul.addr %s150, 96
          %s152 = scalar_lea.vmem [#allocation3], %s151
          %s154 = ssub.s32 1536, 1536
          %155 = vsyncadd %s149, %s154
          %s156 = smul.addr %s16, 12
          %s157 = smul.addr %s156, 128
          %s158 = scalar_lea.hbm %s0, %s157
          %s159 = sshll.u32 %s152, 4
          %s160 = int_to_ptr.vmem [resolvable:$true] %s159
          %165 = dma.hbm_to_vmem [thread:$0]  %s158, 1536, %s160, %s149, 384, 384, 24
        $region28: #{tpu_custom_call.1} parent=23 // pred_fallthru
          _
      $region24: #{tpu_custom_call.1} parent=5 // pred_fallthru
        _
      %p166 = scmp.le.s32.totalorder 1, %s16
      %p167 = scmp.lt.s32.totalorder %s16, 3
      %p168 = pnand %p166, %p167
      %p169 = pneg %p168
      // Predicated region
      $region29: #{tpu_custom_call.1} parent=5 // pred_check
        _
      $region30: #{tpu_custom_call.1} parent=5 // pred_check_branch
        %171 = sbr.rel (%p168) target = $region32
      $region31: #{tpu_custom_call.1} parent=5 // pred_region
        %s172 = ssub.s32 %s16, 1
        %s173 = sand.u32 %s29, 1
        %s174 = scalar_lea.sflag [#allocation4], %s173
        %s175 = sand.u32 %s29, 1
        %s176 = smul.addr %s175, 96
        %s177 = scalar_lea.vmem [#allocation3], %s176
        // Predicated region
        $region33: #{tpu_custom_call.1} parent=31 // pred_check
          %p178 = pneg %p42
        $region34: #{tpu_custom_call.1} parent=31 // pred_check_branch
          %180 = sbr.rel (%p178) target = $region36
        $region35: #{tpu_custom_call.1} parent=31 // pred_region
          %181 = dma.done %s174, 1536
        $region36: #{tpu_custom_call.1} parent=31 // pred_fallthru
          _
        // Predicated region
        $region37: #{tpu_custom_call.1} parent=31 // pred_check
          %p182 = pneg %p63
        $region38: #{tpu_custom_call.1} parent=31 // pred_check_branch
          %184 = sbr.rel (%p182) target = $region40
        $region39: #{tpu_custom_call.1} parent=31 // pred_region
          %185 = dma.done [#allocation7], 2304
        $region40: #{tpu_custom_call.1} parent=31 // pred_fallthru
          _
        %s186 = sand.u32 %s29, 1
        %s187 = scalar_lea.sflag [#allocation4], %s186
        %s188 = sand.u32 %s29, 1
        %s189 = smul.addr %s188, 96
        %s190 = scalar_lea.vmem [#allocation3], %s189
        %p191 = pneg %p42
        %p192 = pneg %p39
        %p193 = pneg %p63
        %p194 = pneg %p60
        %p195 = pneg %p84
        %p196 = pneg %p81
        %p197 = pneg %p110
        %p198 = pneg %p107
        %s199 = sand.u32 %s97, 1
        %s200 = scalar_lea.sflag [#allocation5], %s199
        %s201 = sand.u32 %s97, 1
        %s202 = smul.addr %s201, 96
        %s203 = scalar_lea.vmem [#allocation8], %s202
        %v204 = vld [vmem:[%s177] sm:$0xff]
        %v205 = vld [vmem:[%s177 + $0x8] sm:$0xff]
        %v206 = vld [vmem:[%s177 + $0x10] sm:$0xff]
        %v207 = vld [vmem:[%s177 + $0x18] sm:$0xff]
        %v208 = vld [vmem:[%s177 + $0x20] sm:$0xff]
        %v209 = vld [vmem:[%s177 + $0x28] sm:$0xff]
        %v210 = vld [vmem:[%s177 + $0x30] sm:$0xff]
        %v211 = vld [vmem:[%s177 + $0x38] sm:$0xff]
        %v212 = vld [vmem:[%s177 + $0x40] sm:$0xff]
        %v213 = vld [vmem:[%s177 + $0x48] sm:$0xff]
        %v214 = vld [vmem:[%s177 + $0x50] sm:$0xff]
        %v215 = vld [vmem:[%s177 + $0x58] sm:$0xff]
        %v216 = vmax.f32 %v204, 0.0
        %v217 = vmax.f32 %v205, 0.0
        %v218 = vmax.f32 %v206, 0.0
        %v219 = vmax.f32 %v207, 0.0
        %v220 = vmax.f32 %v208, 0.0
        %v221 = vmax.f32 %v209, 0.0
        %v222 = vmax.f32 %v210, 0.0
        %v223 = vmax.f32 %v211, 0.0
        %v224 = vmax.f32 %v212, 0.0
        %v225 = vmax.f32 %v213, 0.0
        %v226 = vmax.f32 %v214, 0.0
        %v227 = vmax.f32 %v215, 0.0
        %228 = vst [vmem:[#allocation2] sm:$0xff] %v216
        %229 = vst [vmem:[#allocation2 + $0x8] sm:$0xff] %v217
        %vm230 = vcmask 703488
        %231 = vst.msk [vmem:[#allocation2 + $0x10] sm:$0xff] %vm230, %v218
        %232 = vst [vmem:[#allocation2 + $0x18] sm:$0xff] %v219
        %233 = vst [vmem:[#allocation2 + $0x20] sm:$0xff] %v220
        %234 = vst.msk [vmem:[#allocation2 + $0x28] sm:$0xff] %vm230, %v221
        %235 = vst [vmem:[#allocation2 + $0x30] sm:$0xff] %v222
        %236 = vst [vmem:[#allocation2 + $0x38] sm:$0xff] %v223
        %237 = vst.msk [vmem:[#allocation2 + $0x40] sm:$0xff] %vm230, %v224
        %238 = vst [vmem:[#allocation2 + $0x48] sm:$0xff] %v225
        %239 = vst [vmem:[#allocation2 + $0x50] sm:$0xff] %v226
        %240 = vst.msk [vmem:[#allocation2 + $0x58] sm:$0xff] %vm230, %v227
        %v241 = vld [vmem:[#allocation6] sm:$0xff]
        %v242 = vld [vmem:[#allocation6 + $0x8] sm:$0xff]
        %v243 = vld [vmem:[#allocation2] sm:$0xff]
        %v244 = vld [vmem:[#allocation2 + $0x8] sm:$0xff]
        %v245 = vld [vmem:[#allocation2 + $0x10] sm:$0xff]
        %v246 = vld [vmem:[#allocation2 + $0x18] sm:$0xff]
        %v247 = vld [vmem:[#allocation2 + $0x20] sm:$0xff]
        %v248 = vld [vmem:[#allocation2 + $0x28] sm:$0xff]
        %v249 = vld [vmem:[#allocation2 + $0x30] sm:$0xff]
        %v250 = vld [vmem:[#allocation2 + $0x38] sm:$0xff]
        %v251 = vld [vmem:[#allocation2 + $0x40] sm:$0xff]
        %v252 = vld [vmem:[#allocation2 + $0x48] sm:$0xff]
        %v253 = vld [vmem:[#allocation2 + $0x50] sm:$0xff]
        %v254 = vld [vmem:[#allocation2 + $0x58] sm:$0xff]
        %s255 = scalar_lea.vmem [#allocation6], 16
        %v256 = vld [vmem:[%s255] sm:$0xff]
        %v257 = vld [vmem:[%s255 + $0x8] sm:$0xff]
        %270 = vrot.lane.b32.xlu0 %v243, 127
        %v271 = vpop.permute.xlu0 %270
        %272 = vrot.lane.b32.xlu0 %v244, 127
        %v273 = vpop.permute.xlu0 %272
        %274 = vrot.lane.b32.xlu0 %v245, 127
        %v275 = vpop.permute.xlu0 %274
        %276 = vrot.lane.b32.xlu0 %v246, 127
        %v277 = vpop.permute.xlu0 %276
        %278 = vrot.lane.b32.xlu0 %v247, 127
        %v279 = vpop.permute.xlu0 %278
        %280 = vrot.lane.b32.xlu0 %v248, 127
        %v281 = vpop.permute.xlu0 %280
        %282 = vrot.lane.b32.xlu0 %v249, 127
        %v283 = vpop.permute.xlu0 %282
        %284 = vrot.lane.b32.xlu0 %v250, 127
        %v285 = vpop.permute.xlu0 %284
        %286 = vrot.lane.b32.xlu0 %v251, 127
        %v287 = vpop.permute.xlu0 %286
        %288 = vrot.lane.b32.xlu0 %v252, 127
        %v289 = vpop.permute.xlu0 %288
        %290 = vrot.lane.b32.xlu0 %v253, 127
        %v291 = vpop.permute.xlu0 %290
        %292 = vrot.lane.b32.xlu0 %v254, 127
        %v293 = vpop.permute.xlu0 %292
        %vm294 = vcmask 1039360
        %v295 = vsel %vm294, %v271, %v273
        %v296 = vsel %vm294, %v273, %v275
        %v297 = vsel %vm294, %v277, %v279
        %v298 = vsel %vm294, %v279, %v281
        %v299 = vsel %vm294, %v283, %v285
        %v300 = vsel %vm294, %v285, %v287
        %v301 = vsel %vm294, %v289, %v291
        %v302 = vsel %vm294, %v291, %v293
        %vm315 = vcmask 261120
        %v317 = vsel %vm315, %v256, 0
        %v320 = vsel %vm315, %v257, 0
        %322 = vmatprep.subr.mxu0 0.0
        %323 = vmatpush1.msra.mxu0 0.0
        %324 = vmatprep.subr.mxu0 0.0
        %325 = vmatpush1.msra.mxu0 0.0
        %326 = vmatprep.subr.mxu0 0.0
        %327 = vmatpush1.msra.mxu0 0.0
        %328 = vmatprep.subr.mxu0 0.0
        %329 = vmatpush1.msra.mxu0 0.0
        %330 = vmatprep.subr.mxu0 0.0
        %331 = vmatpush1.msra.mxu0 0.0
        %332 = vmatprep.subr.mxu0 0.0
        %333 = vmatpush1.msra.mxu0 0.0
        %334 = vmatprep.subr.mxu0 0.0
        %335 = vmatpush1.msra.mxu0 0.0
        %336 = vmatprep.subr.mxu0 0.0
        %337 = vmatpush1.msra.mxu0 0.0
        %338 = vmatprep.subr.mxu0 0.0
        %339 = vmatpush1.msra.mxu0 0.0
        %340 = vmatprep.subr.mxu0 0.0
        %341 = vmatpush1.msra.mxu0 0.0
        %342 = vmatprep.subr.mxu0 0.0
        %343 = vmatpush1.msra.mxu0 0.0
        %344 = vmatprep.subr.mxu0 0.0
        %345 = vmatpush1.msra.mxu0 0.0
        %346 = vmatprep.subr.mxu0 %v302
        %347 = vmatpush1.msra.mxu0 %v301
        %348 = vmatprep.subr.mxu0 %v300
        %349 = vmatpush1.msra.mxu0 %v299
        %350 = vmatprep.subr.mxu0 %v298
        %351 = vmatpush1.msra.mxu0 %v297
        %352 = vmatprep.subr.mxu0 %v296
        %353 = vmatpush1.msra.mxu0 %v295
        %354 = vmatprep.subr.mxu0 0.0
        %355 = vmatpush2.msra.mxu0 0.0
        %356 = vmatprep.subr.mxu0 0.0
        %357 = vmatpush2.msra.mxu0 0.0
        %358 = vmatprep.subr.mxu0 0.0
        %359 = vmatpush2.msra.mxu0 0.0
        %360 = vmatprep.subr.mxu0 0.0
        %361 = vmatpush2.msra.mxu0 0.0
        %362 = vmatprep.subr.mxu0 0.0
        %363 = vmatpush2.msra.mxu0 0.0
        %364 = vmatprep.subr.mxu0 0.0
        %365 = vmatpush2.msra.mxu0 0.0
        %366 = vmatprep.subr.mxu0 0.0
        %367 = vmatpush2.msra.mxu0 0.0
        %368 = vmatprep.subr.mxu0 0.0
        %369 = vmatpush2.msra.mxu0 0.0
        %370 = vmatprep.subr.mxu0 0.0
        %371 = vmatpush2.msra.mxu0 0.0
        %372 = vmatprep.subr.mxu0 0.0
        %373 = vmatpush2.msra.mxu0 0.0
        %374 = vmatprep.subr.mxu0 0.0
        %375 = vmatpush2.msra.mxu0 0.0
        %376 = vmatprep.subr.mxu0 0.0
        %377 = vmatpush2.msra.mxu0 0.0
        %378 = vmatprep.subr.mxu0 0.0
        %379 = vmatpush2.msra.mxu0 0.0
        %380 = vmatprep.subr.mxu0 0.0
        %381 = vmatpush2.msra.mxu0 0.0
        %382 = vmatprep.subr.mxu0 0.0
        %383 = vmatpush2.msra.mxu0 0.0
        %384 = vmatprep.subr.mxu0 0.0
        %385 = vmatpush2.msra.mxu0 0.0
        %386 = vmatprep.mubr.f32.mxu0 0.0
        %387 = vmatmul.mubr.f32.gmra.mxu0 %v317
        %v388 = vpop.f32.mrf.mxu0
        %v389 = vadd.f32 0.0, %v388
        %v390 = vpop.f32.mrf.mxu0
        %v391 = vadd.f32 0.0, %v390
        %392 = vmatprep.mubr.f32.mxu0 0.0
        %393 = vmatmul.mubr.f32.gmra.mxu0 %v320
        %v394 = vpop.f32.mrf.mxu0
        %v395 = vadd.f32 0.0, %v394
        %v396 = vpop.f32.mrf.mxu0
        %v397 = vadd.f32 0.0, %v396
        %398 = vdwg.mxu0
        %399 = vmatprep.subr.mxu0 0.0
        %400 = vmatpush1.msra.mxu0 0.0
        %401 = vmatprep.subr.mxu0 0.0
        %402 = vmatpush1.msra.mxu0 0.0
        %403 = vmatprep.subr.mxu0 0.0
        %404 = vmatpush1.msra.mxu0 0.0
        %405 = vmatprep.subr.mxu0 0.0
        %406 = vmatpush1.msra.mxu0 0.0
        %407 = vmatprep.subr.mxu0 0.0
        %408 = vmatpush1.msra.mxu0 0.0
        %409 = vmatprep.subr.mxu0 0.0
        %410 = vmatpush1.msra.mxu0 0.0
        %411 = vmatprep.subr.mxu0 0.0
        %412 = vmatpush1.msra.mxu0 0.0
        %413 = vmatprep.subr.mxu0 0.0
        %414 = vmatpush1.msra.mxu0 0.0
        %415 = vmatprep.subr.mxu0 0.0
        %416 = vmatpush1.msra.mxu0 0.0
        %417 = vmatprep.subr.mxu0 0.0
        %418 = vmatpush1.msra.mxu0 0.0
        %419 = vmatprep.subr.mxu0 0.0
        %420 = vmatpush1.msra.mxu0 0.0
        %421 = vmatprep.subr.mxu0 0.0
        %422 = vmatpush1.msra.mxu0 0.0
        %423 = vmatprep.subr.mxu0 0.0
        %424 = vmatpush1.msra.mxu0 %v293
        %425 = vmatprep.subr.mxu0 0.0
        %426 = vmatpush1.msra.mxu0 %v287
        %427 = vmatprep.subr.mxu0 0.0
        %428 = vmatpush1.msra.mxu0 %v281
        %429 = vmatprep.subr.mxu0 0.0
        %430 = vmatpush1.msra.mxu0 %v275
        %431 = vmatprep.subr.mxu0 0.0
        %432 = vmatpush2.msra.mxu0 0.0
        %433 = vmatprep.subr.mxu0 0.0
        %434 = vmatpush2.msra.mxu0 0.0
        %435 = vmatprep.subr.mxu0 0.0
        %436 = vmatpush2.msra.mxu0 0.0
        %437 = vmatprep.subr.mxu0 0.0
        %438 = vmatpush2.msra.mxu0 0.0
        %439 = vmatprep.subr.mxu0 0.0
        %440 = vmatpush2.msra.mxu0 0.0
        %441 = vmatprep.subr.mxu0 0.0
        %442 = vmatpush2.msra.mxu0 0.0
        %443 = vmatprep.subr.mxu0 0.0
        %444 = vmatpush2.msra.mxu0 0.0
        %445 = vmatprep.subr.mxu0 0.0
        %446 = vmatpush2.msra.mxu0 0.0
        %447 = vmatprep.subr.mxu0 0.0
        %448 = vmatpush2.msra.mxu0 0.0
        %449 = vmatprep.subr.mxu0 0.0
        %450 = vmatpush2.msra.mxu0 0.0
        %451 = vmatprep.subr.mxu0 0.0
        %452 = vmatpush2.msra.mxu0 0.0
        %453 = vmatprep.subr.mxu0 0.0
        %454 = vmatpush2.msra.mxu0 0.0
        %455 = vmatprep.subr.mxu0 0.0
        %456 = vmatpush2.msra.mxu0 0.0
        %457 = vmatprep.subr.mxu0 0.0
        %458 = vmatpush2.msra.mxu0 0.0
        %459 = vmatprep.subr.mxu0 0.0
        %460 = vmatpush2.msra.mxu0 0.0
        %461 = vmatprep.subr.mxu0 0.0
        %462 = vmatpush2.msra.mxu0 0.0
        %463 = vmatprep.mubr.f32.mxu0 0.0
        %464 = vmatmul.mubr.f32.gmra.mxu0 %v317
        %v465 = vpop.f32.mrf.mxu0
        %v466 = vadd.f32 0.0, %v465
        %v467 = vpop.f32.mrf.mxu0
        %468 = vmatprep.mubr.f32.mxu0 0.0
        %469 = vmatmul.mubr.f32.gmra.mxu0 %v320
        %v470 = vpop.f32.mrf.mxu0
        %v471 = vadd.f32 0.0, %v470
        %v472 = vpop.f32.mrf.mxu0
        %473 = vdwg.mxu0
        %v475 = vsel %vm315, %v241, 0
        %v478 = vsel %vm315, %v242, 0
        %480 = vmatprep.subr.mxu0 0.0
        %481 = vmatpush1.msra.mxu0 0.0
        %482 = vmatprep.subr.mxu0 0.0
        %483 = vmatpush1.msra.mxu0 0.0
        %484 = vmatprep.subr.mxu0 0.0
        %485 = vmatpush1.msra.mxu0 0.0
        %486 = vmatprep.subr.mxu0 0.0
        %487 = vmatpush1.msra.mxu0 0.0
        %488 = vmatprep.subr.mxu0 0.0
        %489 = vmatpush1.msra.mxu0 0.0
        %490 = vmatprep.subr.mxu0 0.0
        %491 = vmatpush1.msra.mxu0 0.0
        %492 = vmatprep.subr.mxu0 0.0
        %493 = vmatpush1.msra.mxu0 0.0
        %494 = vmatprep.subr.mxu0 0.0
        %495 = vmatpush1.msra.mxu0 0.0
        %496 = vmatprep.subr.mxu0 0.0
        %497 = vmatpush1.msra.mxu0 0.0
        %498 = vmatprep.subr.mxu0 0.0
        %499 = vmatpush1.msra.mxu0 0.0
        %500 = vmatprep.subr.mxu0 0.0
        %501 = vmatpush1.msra.mxu0 0.0
        %502 = vmatprep.subr.mxu0 0.0
        %503 = vmatpush1.msra.mxu0 0.0
        %504 = vmatprep.subr.mxu0 %v253
        %505 = vmatpush1.msra.mxu0 %v252
        %506 = vmatprep.subr.mxu0 %v250
        %507 = vmatpush1.msra.mxu0 %v249
        %508 = vmatprep.subr.mxu0 %v247
        %509 = vmatpush1.msra.mxu0 %v246
        %510 = vmatprep.subr.mxu0 %v244
        %511 = vmatpush1.msra.mxu0 %v243
        %512 = vmatprep.subr.mxu0 0.0
        %513 = vmatpush2.msra.mxu0 0.0
        %514 = vmatprep.subr.mxu0 0.0
        %515 = vmatpush2.msra.mxu0 0.0
        %516 = vmatprep.subr.mxu0 0.0
        %517 = vmatpush2.msra.mxu0 0.0
        %518 = vmatprep.subr.mxu0 0.0
        %519 = vmatpush2.msra.mxu0 0.0
        %520 = vmatprep.subr.mxu0 0.0
        %521 = vmatpush2.msra.mxu0 0.0
        %522 = vmatprep.subr.mxu0 0.0
        %523 = vmatpush2.msra.mxu0 0.0
        %524 = vmatprep.subr.mxu0 0.0
        %525 = vmatpush2.msra.mxu0 0.0
        %526 = vmatprep.subr.mxu0 0.0
        %527 = vmatpush2.msra.mxu0 0.0
        %528 = vmatprep.subr.mxu0 0.0
        %529 = vmatpush2.msra.mxu0 0.0
        %530 = vmatprep.subr.mxu0 0.0
        %531 = vmatpush2.msra.mxu0 0.0
        %532 = vmatprep.subr.mxu0 0.0
        %533 = vmatpush2.msra.mxu0 0.0
        %534 = vmatprep.subr.mxu0 0.0
        %535 = vmatpush2.msra.mxu0 0.0
        %536 = vmatprep.subr.mxu0 0.0
        %537 = vmatpush2.msra.mxu0 0.0
        %538 = vmatprep.subr.mxu0 0.0
        %539 = vmatpush2.msra.mxu0 0.0
        %540 = vmatprep.subr.mxu0 0.0
        %541 = vmatpush2.msra.mxu0 0.0
        %542 = vmatprep.subr.mxu0 0.0
        %543 = vmatpush2.msra.mxu0 0.0
        %544 = vmatprep.mubr.f32.mxu0 0.0
        %545 = vmatmul.mubr.f32.gmra.mxu0 %v475
        %v546 = vpop.f32.mrf.mxu0
        %v547 = vadd.f32 %v389, %v546
        %v548 = vpop.f32.mrf.mxu0
        %v549 = vadd.f32 %v391, %v548
        %550 = vmatprep.mubr.f32.mxu0 0.0
        %551 = vmatmul.mubr.f32.gmra.mxu0 %v478
        %v552 = vpop.f32.mrf.mxu0
        %v553 = vadd.f32 %v395, %v552
        %v554 = vpop.f32.mrf.mxu0
        %v555 = vadd.f32 %v397, %v554
        %556 = vdwg.mxu0
        %557 = vmatprep.subr.mxu0 0.0
        %558 = vmatpush1.msra.mxu0 0.0
        %559 = vmatprep.subr.mxu0 0.0
        %560 = vmatpush1.msra.mxu0 0.0
        %561 = vmatprep.subr.mxu0 0.0
        %562 = vmatpush1.msra.mxu0 0.0
        %563 = vmatprep.subr.mxu0 0.0
        %564 = vmatpush1.msra.mxu0 0.0
        %565 = vmatprep.subr.mxu0 0.0
        %566 = vmatpush1.msra.mxu0 0.0
        %567 = vmatprep.subr.mxu0 0.0
        %568 = vmatpush1.msra.mxu0 0.0
        %569 = vmatprep.subr.mxu0 0.0
        %570 = vmatpush1.msra.mxu0 0.0
        %571 = vmatprep.subr.mxu0 0.0
        %572 = vmatpush1.msra.mxu0 0.0
        %573 = vmatprep.subr.mxu0 0.0
        %574 = vmatpush1.msra.mxu0 0.0
        %575 = vmatprep.subr.mxu0 0.0
        %576 = vmatpush1.msra.mxu0 0.0
        %577 = vmatprep.subr.mxu0 0.0
        %578 = vmatpush1.msra.mxu0 0.0
        %579 = vmatprep.subr.mxu0 0.0
        %580 = vmatpush1.msra.mxu0 0.0
        %581 = vmatprep.subr.mxu0 0.0
        %582 = vmatpush1.msra.mxu0 %v254
        %583 = vmatprep.subr.mxu0 0.0
        %584 = vmatpush1.msra.mxu0 %v251
        %585 = vmatprep.subr.mxu0 0.0
        %586 = vmatpush1.msra.mxu0 %v248
        %587 = vmatprep.subr.mxu0 0.0
        %588 = vmatpush1.msra.mxu0 %v245
        %589 = vmatprep.subr.mxu0 0.0
        %590 = vmatpush2.msra.mxu0 0.0
        %591 = vmatprep.subr.mxu0 0.0
        %592 = vmatpush2.msra.mxu0 0.0
        %593 = vmatprep.subr.mxu0 0.0
        %594 = vmatpush2.msra.mxu0 0.0
        %595 = vmatprep.subr.mxu0 0.0
        %596 = vmatpush2.msra.mxu0 0.0
        %597 = vmatprep.subr.mxu0 0.0
        %598 = vmatpush2.msra.mxu0 0.0
        %599 = vmatprep.subr.mxu0 0.0
        %600 = vmatpush2.msra.mxu0 0.0
        %601 = vmatprep.subr.mxu0 0.0
        %602 = vmatpush2.msra.mxu0 0.0
        %603 = vmatprep.subr.mxu0 0.0
        %604 = vmatpush2.msra.mxu0 0.0
        %605 = vmatprep.subr.mxu0 0.0
        %606 = vmatpush2.msra.mxu0 0.0
        %607 = vmatprep.subr.mxu0 0.0
        %608 = vmatpush2.msra.mxu0 0.0
        %609 = vmatprep.subr.mxu0 0.0
        %610 = vmatpush2.msra.mxu0 0.0
        %611 = vmatprep.subr.mxu0 0.0
        %612 = vmatpush2.msra.mxu0 0.0
        %613 = vmatprep.subr.mxu0 0.0
        %614 = vmatpush2.msra.mxu0 0.0
        %615 = vmatprep.subr.mxu0 0.0
        %616 = vmatpush2.msra.mxu0 0.0
        %617 = vmatprep.subr.mxu0 0.0
        %618 = vmatpush2.msra.mxu0 0.0
        %619 = vmatprep.subr.mxu0 0.0
        %620 = vmatpush2.msra.mxu0 0.0
        %621 = vmatprep.mubr.f32.mxu0 0.0
        %622 = vmatmul.mubr.f32.gmra.mxu0 %v475
        %v623 = vpop.f32.mrf.mxu0
        %v624 = vadd.f32 %v466, %v623
        %v625 = vpop.f32.mrf.mxu0
        %626 = vmatprep.mubr.f32.mxu0 0.0
        %627 = vmatmul.mubr.f32.gmra.mxu0 %v478
        %v628 = vpop.f32.mrf.mxu0
        %v629 = vadd.f32 %v471, %v628
        %v630 = vpop.f32.mrf.mxu0
        %631 = vdwg.mxu0
        %s632 = scalar_lea.vmem [#allocation6], 32
        %v633 = vld [vmem:[%s632] sm:$0xff]
        %v634 = vld [vmem:[%s632 + $0x8] sm:$0xff]
        %635 = vrot.lane.b32.xlu0 %v243, 126
        %v636 = vpop.permute.xlu0 %635
        %637 = vrot.lane.b32.xlu0 %v244, 126
        %v638 = vpop.permute.xlu0 %637
        %639 = vrot.lane.b32.xlu0 %v245, 126
        %v640 = vpop.permute.xlu0 %639
        %641 = vrot.lane.b32.xlu0 %v246, 126
        %v642 = vpop.permute.xlu0 %641
        %643 = vrot.lane.b32.xlu0 %v247, 126
        %v644 = vpop.permute.xlu0 %643
        %645 = vrot.lane.b32.xlu0 %v248, 126
        %v646 = vpop.permute.xlu0 %645
        %647 = vrot.lane.b32.xlu0 %v249, 126
        %v648 = vpop.permute.xlu0 %647
        %649 = vrot.lane.b32.xlu0 %v250, 126
        %v650 = vpop.permute.xlu0 %649
        %651 = vrot.lane.b32.xlu0 %v251, 126
        %v652 = vpop.permute.xlu0 %651
        %653 = vrot.lane.b32.xlu0 %v252, 126
        %v654 = vpop.permute.xlu0 %653
        %655 = vrot.lane.b32.xlu0 %v253, 126
        %v656 = vpop.permute.xlu0 %655
        %657 = vrot.lane.b32.xlu0 %v254, 126
        %v658 = vpop.permute.xlu0 %657
        %vm659 = vcmask 1031168
        %v660 = vsel %vm659, %v636, %v638
        %v661 = vsel %vm659, %v638, %v640
        %v662 = vsel %vm659, %v642, %v644
        %v663 = vsel %vm659, %v644, %v646
        %v664 = vsel %vm659, %v648, %v650
        %v665 = vsel %vm659, %v650, %v652
        %v666 = vsel %vm659, %v654, %v656
        %v667 = vsel %vm659, %v656, %v658
        %v681 = vsel %vm315, %v633, 0
        %v684 = vsel %vm315, %v634, 0
        %686 = vmatprep.subr.mxu0 0.0
        %687 = vmatpush1.msra.mxu0 0.0
        %688 = vmatprep.subr.mxu0 0.0
        %689 = vmatpush1.msra.mxu0 0.0
        %690 = vmatprep.subr.mxu0 0.0
        %691 = vmatpush1.msra.mxu0 0.0
        %692 = vmatprep.subr.mxu0 0.0
        %693 = vmatpush1.msra.mxu0 0.0
        %694 = vmatprep.subr.mxu0 0.0
        %695 = vmatpush1.msra.mxu0 0.0
        %696 = vmatprep.subr.mxu0 0.0
        %697 = vmatpush1.msra.mxu0 0.0
        %698 = vmatprep.subr.mxu0 0.0
        %699 = vmatpush1.msra.mxu0 0.0
        %700 = vmatprep.subr.mxu0 0.0
        %701 = vmatpush1.msra.mxu0 0.0
        %702 = vmatprep.subr.mxu0 0.0
        %703 = vmatpush1.msra.mxu0 0.0
        %704 = vmatprep.subr.mxu0 0.0
        %705 = vmatpush1.msra.mxu0 0.0
        %706 = vmatprep.subr.mxu0 0.0
        %707 = vmatpush1.msra.mxu0 0.0
        %708 = vmatprep.subr.mxu0 0.0
        %709 = vmatpush1.msra.mxu0 0.0
        %710 = vmatprep.subr.mxu0 %v667
        %711 = vmatpush1.msra.mxu0 %v666
        %712 = vmatprep.subr.mxu0 %v665
        %713 = vmatpush1.msra.mxu0 %v664
        %714 = vmatprep.subr.mxu0 %v663
        %715 = vmatpush1.msra.mxu0 %v662
        %716 = vmatprep.subr.mxu0 %v661
        %717 = vmatpush1.msra.mxu0 %v660
        %718 = vmatprep.subr.mxu0 0.0
        %719 = vmatpush2.msra.mxu0 0.0
        %720 = vmatprep.subr.mxu0 0.0
        %721 = vmatpush2.msra.mxu0 0.0
        %722 = vmatprep.subr.mxu0 0.0
        %723 = vmatpush2.msra.mxu0 0.0
        %724 = vmatprep.subr.mxu0 0.0
        %725 = vmatpush2.msra.mxu0 0.0
        %726 = vmatprep.subr.mxu0 0.0
        %727 = vmatpush2.msra.mxu0 0.0
        %728 = vmatprep.subr.mxu0 0.0
        %729 = vmatpush2.msra.mxu0 0.0
        %730 = vmatprep.subr.mxu0 0.0
        %731 = vmatpush2.msra.mxu0 0.0
        %732 = vmatprep.subr.mxu0 0.0
        %733 = vmatpush2.msra.mxu0 0.0
        %734 = vmatprep.subr.mxu0 0.0
        %735 = vmatpush2.msra.mxu0 0.0
        %736 = vmatprep.subr.mxu0 0.0
        %737 = vmatpush2.msra.mxu0 0.0
        %738 = vmatprep.subr.mxu0 0.0
        %739 = vmatpush2.msra.mxu0 0.0
        %740 = vmatprep.subr.mxu0 0.0
        %741 = vmatpush2.msra.mxu0 0.0
        %742 = vmatprep.subr.mxu0 0.0
        %743 = vmatpush2.msra.mxu0 0.0
        %744 = vmatprep.subr.mxu0 0.0
        %745 = vmatpush2.msra.mxu0 0.0
        %746 = vmatprep.subr.mxu0 0.0
        %747 = vmatpush2.msra.mxu0 0.0
        %748 = vmatprep.subr.mxu0 0.0
        %749 = vmatpush2.msra.mxu0 0.0
        %750 = vmatprep.mubr.f32.mxu0 0.0
        %751 = vmatmul.mubr.f32.gmra.mxu0 %v681
        %v752 = vpop.f32.mrf.mxu0
        %v753 = vadd.f32 0.0, %v752
        %v754 = vpop.f32.mrf.mxu0
        %v755 = vadd.f32 0.0, %v754
        %756 = vmatprep.mubr.f32.mxu0 0.0
        %757 = vmatmul.mubr.f32.gmra.mxu0 %v684
        %v758 = vpop.f32.mrf.mxu0
        %v759 = vadd.f32 0.0, %v758
        %v760 = vpop.f32.mrf.mxu0
        %v761 = vadd.f32 0.0, %v760
        %762 = vdwg.mxu0
        %763 = vmatprep.subr.mxu0 0.0
        %764 = vmatpush1.msra.mxu0 0.0
        %765 = vmatprep.subr.mxu0 0.0
        %766 = vmatpush1.msra.mxu0 0.0
        %767 = vmatprep.subr.mxu0 0.0
        %768 = vmatpush1.msra.mxu0 0.0
        %769 = vmatprep.subr.mxu0 0.0
        %770 = vmatpush1.msra.mxu0 0.0
        %771 = vmatprep.subr.mxu0 0.0
        %772 = vmatpush1.msra.mxu0 0.0
        %773 = vmatprep.subr.mxu0 0.0
        %774 = vmatpush1.msra.mxu0 0.0
        %775 = vmatprep.subr.mxu0 0.0
        %776 = vmatpush1.msra.mxu0 0.0
        %777 = vmatprep.subr.mxu0 0.0
        %778 = vmatpush1.msra.mxu0 0.0
        %779 = vmatprep.subr.mxu0 0.0
        %780 = vmatpush1.msra.mxu0 0.0
        %781 = vmatprep.subr.mxu0 0.0
        %782 = vmatpush1.msra.mxu0 0.0
        %783 = vmatprep.subr.mxu0 0.0
        %784 = vmatpush1.msra.mxu0 0.0
        %785 = vmatprep.subr.mxu0 0.0
        %786 = vmatpush1.msra.mxu0 0.0
        %787 = vmatprep.subr.mxu0 0.0
        %788 = vmatpush1.msra.mxu0 %v658
        %789 = vmatprep.subr.mxu0 0.0
        %790 = vmatpush1.msra.mxu0 %v652
        %791 = vmatprep.subr.mxu0 0.0
        %792 = vmatpush1.msra.mxu0 %v646
        %793 = vmatprep.subr.mxu0 0.0
        %794 = vmatpush1.msra.mxu0 %v640
        %795 = vmatprep.subr.mxu0 0.0
        %796 = vmatpush2.msra.mxu0 0.0
        %797 = vmatprep.subr.mxu0 0.0
        %798 = vmatpush2.msra.mxu0 0.0
        %799 = vmatprep.subr.mxu0 0.0
        %800 = vmatpush2.msra.mxu0 0.0
        %801 = vmatprep.subr.mxu0 0.0
        %802 = vmatpush2.msra.mxu0 0.0
        %803 = vmatprep.subr.mxu0 0.0
        %804 = vmatpush2.msra.mxu0 0.0
        %805 = vmatprep.subr.mxu0 0.0
        %806 = vmatpush2.msra.mxu0 0.0
        %807 = vmatprep.subr.mxu0 0.0
        %808 = vmatpush2.msra.mxu0 0.0
        %809 = vmatprep.subr.mxu0 0.0
        %810 = vmatpush2.msra.mxu0 0.0
        %811 = vmatprep.subr.mxu0 0.0
        %812 = vmatpush2.msra.mxu0 0.0
        %813 = vmatprep.subr.mxu0 0.0
        %814 = vmatpush2.msra.mxu0 0.0
        %815 = vmatprep.subr.mxu0 0.0
        %816 = vmatpush2.msra.mxu0 0.0
        %817 = vmatprep.subr.mxu0 0.0
        %818 = vmatpush2.msra.mxu0 0.0
        %819 = vmatprep.subr.mxu0 0.0
        %820 = vmatpush2.msra.mxu0 0.0
        %821 = vmatprep.subr.mxu0 0.0
        %822 = vmatpush2.msra.mxu0 0.0
        %823 = vmatprep.subr.mxu0 0.0
        %824 = vmatpush2.msra.mxu0 0.0
        %825 = vmatprep.subr.mxu0 0.0
        %826 = vmatpush2.msra.mxu0 0.0
        %827 = vmatprep.mubr.f32.mxu0 0.0
        %828 = vmatmul.mubr.f32.gmra.mxu0 %v681
        %v829 = vpop.f32.mrf.mxu0
        %v830 = vadd.f32 0.0, %v829
        %v831 = vpop.f32.mrf.mxu0
        %832 = vmatprep.mubr.f32.mxu0 0.0
        %833 = vmatmul.mubr.f32.gmra.mxu0 %v684
        %v834 = vpop.f32.mrf.mxu0
        %v835 = vadd.f32 0.0, %v834
        %v836 = vpop.f32.mrf.mxu0
        %837 = vdwg.mxu0
        %v838 = vadd.f32 %v547, %v753
        %v839 = vadd.f32 %v549, %v755
        %v840 = vadd.f32 %v624, %v830
        %v841 = vadd.f32 %v553, %v759
        %v842 = vadd.f32 %v555, %v761
        %v843 = vadd.f32 %v629, %v835
        %s844 = scalar_lea.vmem [#allocation6], 48
        %v845 = vld [vmem:[%s844] sm:$0xff]
        %v846 = vld [vmem:[%s844 + $0x8] sm:$0xff]
        %847 = vrot.lane.b32.xlu0 %v243, 110
        %v848 = vpop.permute.xlu0 %847
        %849 = vrot.lane.b32.xlu0 %v244, 110
        %v850 = vpop.permute.xlu0 %849
        %851 = vrot.lane.b32.xlu0 %v245, 110
        %v852 = vpop.permute.xlu0 %851
        %853 = vrot.lane.b32.xlu0 %v246, 110
        %v854 = vpop.permute.xlu0 %853
        %855 = vrot.lane.b32.xlu0 %v247, 110
        %v856 = vpop.permute.xlu0 %855
        %857 = vrot.lane.b32.xlu0 %v248, 110
        %v858 = vpop.permute.xlu0 %857
        %859 = vrot.lane.b32.xlu0 %v249, 110
        %v860 = vpop.permute.xlu0 %859
        %861 = vrot.lane.b32.xlu0 %v250, 110
        %v862 = vpop.permute.xlu0 %861
        %863 = vrot.lane.b32.xlu0 %v251, 110
        %v864 = vpop.permute.xlu0 %863
        %865 = vrot.lane.b32.xlu0 %v252, 110
        %v866 = vpop.permute.xlu0 %865
        %867 = vrot.lane.b32.xlu0 %v253, 110
        %v868 = vpop.permute.xlu0 %867
        %869 = vrot.lane.b32.xlu0 %v254, 110
        %v870 = vpop.permute.xlu0 %869
        %vm871 = vcmask 900096
        %v872 = vsel %vm871, %v848, %v850
        %v873 = vsel %vm871, %v850, %v852
        %v874 = vsel %vm871, %v854, %v856
        %v875 = vsel %vm871, %v856, %v858
        %v876 = vsel %vm871, %v860, %v862
        %v877 = vsel %vm871, %v862, %v864
        %v878 = vsel %vm871, %v866, %v868
        %v879 = vsel %vm871, %v868, %v870
        %v893 = vsel %vm315, %v845, 0
        %v896 = vsel %vm315, %v846, 0
        %898 = vmatprep.subr.mxu0 0.0
        %899 = vmatpush1.msra.mxu0 0.0
        %900 = vmatprep.subr.mxu0 0.0
        %901 = vmatpush1.msra.mxu0 0.0
        %902 = vmatprep.subr.mxu0 0.0
        %903 = vmatpush1.msra.mxu0 0.0
        %904 = vmatprep.subr.mxu0 0.0
        %905 = vmatpush1.msra.mxu0 0.0
        %906 = vmatprep.subr.mxu0 0.0
        %907 = vmatpush1.msra.mxu0 0.0
        %908 = vmatprep.subr.mxu0 0.0
        %909 = vmatpush1.msra.mxu0 0.0
        %910 = vmatprep.subr.mxu0 0.0
        %911 = vmatpush1.msra.mxu0 0.0
        %912 = vmatprep.subr.mxu0 0.0
        %913 = vmatpush1.msra.mxu0 0.0
        %914 = vmatprep.subr.mxu0 0.0
        %915 = vmatpush1.msra.mxu0 0.0
        %916 = vmatprep.subr.mxu0 0.0
        %917 = vmatpush1.msra.mxu0 0.0
        %918 = vmatprep.subr.mxu0 0.0
        %919 = vmatpush1.msra.mxu0 0.0
        %920 = vmatprep.subr.mxu0 0.0
        %921 = vmatpush1.msra.mxu0 0.0
        %922 = vmatprep.subr.mxu0 %v879
        %923 = vmatpush1.msra.mxu0 %v878
        %924 = vmatprep.subr.mxu0 %v877
        %925 = vmatpush1.msra.mxu0 %v876
        %926 = vmatprep.subr.mxu0 %v875
        %927 = vmatpush1.msra.mxu0 %v874
        %928 = vmatprep.subr.mxu0 %v873
        %929 = vmatpush1.msra.mxu0 %v872
        %930 = vmatprep.subr.mxu0 0.0
        %931 = vmatpush2.msra.mxu0 0.0
        %932 = vmatprep.subr.mxu0 0.0
        %933 = vmatpush2.msra.mxu0 0.0
        %934 = vmatprep.subr.mxu0 0.0
        %935 = vmatpush2.msra.mxu0 0.0
        %936 = vmatprep.subr.mxu0 0.0
        %937 = vmatpush2.msra.mxu0 0.0
        %938 = vmatprep.subr.mxu0 0.0
        %939 = vmatpush2.msra.mxu0 0.0
        %940 = vmatprep.subr.mxu0 0.0
        %941 = vmatpush2.msra.mxu0 0.0
        %942 = vmatprep.subr.mxu0 0.0
        %943 = vmatpush2.msra.mxu0 0.0
        %944 = vmatprep.subr.mxu0 0.0
        %945 = vmatpush2.msra.mxu0 0.0
        %946 = vmatprep.subr.mxu0 0.0
        %947 = vmatpush2.msra.mxu0 0.0
        %948 = vmatprep.subr.mxu0 0.0
        %949 = vmatpush2.msra.mxu0 0.0
        %950 = vmatprep.subr.mxu0 0.0
        %951 = vmatpush2.msra.mxu0 0.0
        %952 = vmatprep.subr.mxu0 0.0
        %953 = vmatpush2.msra.mxu0 0.0
        %954 = vmatprep.subr.mxu0 0.0
        %955 = vmatpush2.msra.mxu0 0.0
        %956 = vmatprep.subr.mxu0 0.0
        %957 = vmatpush2.msra.mxu0 0.0
        %958 = vmatprep.subr.mxu0 0.0
        %959 = vmatpush2.msra.mxu0 0.0
        %960 = vmatprep.subr.mxu0 0.0
        %961 = vmatpush2.msra.mxu0 0.0
        %962 = vmatprep.mubr.f32.mxu0 0.0
        %963 = vmatmul.mubr.f32.gmra.mxu0 %v893
        %v964 = vpop.f32.mrf.mxu0
        %v965 = vadd.f32 0.0, %v964
        %v966 = vpop.f32.mrf.mxu0
        %v967 = vadd.f32 0.0, %v966
        %968 = vmatprep.mubr.f32.mxu0 0.0
        %969 = vmatmul.mubr.f32.gmra.mxu0 %v896
        %v970 = vpop.f32.mrf.mxu0
        %v971 = vadd.f32 0.0, %v970
        %v972 = vpop.f32.mrf.mxu0
        %v973 = vadd.f32 0.0, %v972
        %974 = vdwg.mxu0
        %975 = vmatprep.subr.mxu0 0.0
        %976 = vmatpush1.msra.mxu0 0.0
        %977 = vmatprep.subr.mxu0 0.0
        %978 = vmatpush1.msra.mxu0 0.0
        %979 = vmatprep.subr.mxu0 0.0
        %980 = vmatpush1.msra.mxu0 0.0
        %981 = vmatprep.subr.mxu0 0.0
        %982 = vmatpush1.msra.mxu0 0.0
        %983 = vmatprep.subr.mxu0 0.0
        %984 = vmatpush1.msra.mxu0 0.0
        %985 = vmatprep.subr.mxu0 0.0
        %986 = vmatpush1.msra.mxu0 0.0
        %987 = vmatprep.subr.mxu0 0.0
        %988 = vmatpush1.msra.mxu0 0.0
        %989 = vmatprep.subr.mxu0 0.0
        %990 = vmatpush1.msra.mxu0 0.0
        %991 = vmatprep.subr.mxu0 0.0
        %992 = vmatpush1.msra.mxu0 0.0
        %993 = vmatprep.subr.mxu0 0.0
        %994 = vmatpush1.msra.mxu0 0.0
        %995 = vmatprep.subr.mxu0 0.0
        %996 = vmatpush1.msra.mxu0 0.0
        %997 = vmatprep.subr.mxu0 0.0
        %998 = vmatpush1.msra.mxu0 0.0
        %999 = vmatprep.subr.mxu0 0.0
        %1000 = vmatpush1.msra.mxu0 %v870
        %1001 = vmatprep.subr.mxu0 0.0
        %1002 = vmatpush1.msra.mxu0 %v864
        %1003 = vmatprep.subr.mxu0 0.0
        %1004 = vmatpush1.msra.mxu0 %v858
        %1005 = vmatprep.subr.mxu0 0.0
        %1006 = vmatpush1.msra.mxu0 %v852
        %1007 = vmatprep.subr.mxu0 0.0
        %1008 = vmatpush2.msra.mxu0 0.0
        %1009 = vmatprep.subr.mxu0 0.0
        %1010 = vmatpush2.msra.mxu0 0.0
        %1011 = vmatprep.subr.mxu0 0.0
        %1012 = vmatpush2.msra.mxu0 0.0
        %1013 = vmatprep.subr.mxu0 0.0
        %1014 = vmatpush2.msra.mxu0 0.0
        %1015 = vmatprep.subr.mxu0 0.0
        %1016 = vmatpush2.msra.mxu0 0.0
        %1017 = vmatprep.subr.mxu0 0.0
        %1018 = vmatpush2.msra.mxu0 0.0
        %1019 = vmatprep.subr.mxu0 0.0
        %1020 = vmatpush2.msra.mxu0 0.0
        %1021 = vmatprep.subr.mxu0 0.0
        %1022 = vmatpush2.msra.mxu0 0.0
        %1023 = vmatprep.subr.mxu0 0.0
        %1024 = vmatpush2.msra.mxu0 0.0
        %1025 = vmatprep.subr.mxu0 0.0
        %1026 = vmatpush2.msra.mxu0 0.0
        %1027 = vmatprep.subr.mxu0 0.0
        %1028 = vmatpush2.msra.mxu0 0.0
        %1029 = vmatprep.subr.mxu0 0.0
        %1030 = vmatpush2.msra.mxu0 0.0
        %1031 = vmatprep.subr.mxu0 0.0
        %1032 = vmatpush2.msra.mxu0 0.0
        %1033 = vmatprep.subr.mxu0 0.0
        %1034 = vmatpush2.msra.mxu0 0.0
        %1035 = vmatprep.subr.mxu0 0.0
        %1036 = vmatpush2.msra.mxu0 0.0
        %1037 = vmatprep.subr.mxu0 0.0
        %1038 = vmatpush2.msra.mxu0 0.0
        %1039 = vmatprep.mubr.f32.mxu0 0.0
        %1040 = vmatmul.mubr.f32.gmra.mxu0 %v893
        %v1041 = vpop.f32.mrf.mxu0
        %v1042 = vadd.f32 0.0, %v1041
        %v1043 = vpop.f32.mrf.mxu0
        %1044 = vmatprep.mubr.f32.mxu0 0.0
        %1045 = vmatmul.mubr.f32.gmra.mxu0 %v896
        %v1046 = vpop.f32.mrf.mxu0
        %v1047 = vadd.f32 0.0, %v1046
        %v1048 = vpop.f32.mrf.mxu0
        %1049 = vdwg.mxu0
        %v1050 = vadd.f32 %v838, %v965
        %v1051 = vadd.f32 %v839, %v967
        %v1052 = vadd.f32 %v840, %v1042
        %v1053 = vadd.f32 %v841, %v971
        %v1054 = vadd.f32 %v842, %v973
        %v1055 = vadd.f32 %v843, %v1047
        %s1056 = scalar_lea.vmem [#allocation6], 64
        %v1057 = vld [vmem:[%s1056] sm:$0xff]
        %v1058 = vld [vmem:[%s1056 + $0x8] sm:$0xff]
        %1059 = vrot.lane.b32.xlu0 %v243, 109
        %v1060 = vpop.permute.xlu0 %1059
        %1061 = vrot.lane.b32.xlu0 %v244, 109
        %v1062 = vpop.permute.xlu0 %1061
        %1063 = vrot.lane.b32.xlu0 %v245, 109
        %v1064 = vpop.permute.xlu0 %1063
        %1065 = vrot.lane.b32.xlu0 %v246, 109
        %v1066 = vpop.permute.xlu0 %1065
        %1067 = vrot.lane.b32.xlu0 %v247, 109
        %v1068 = vpop.permute.xlu0 %1067
        %1069 = vrot.lane.b32.xlu0 %v248, 109
        %v1070 = vpop.permute.xlu0 %1069
        %1071 = vrot.lane.b32.xlu0 %v249, 109
        %v1072 = vpop.permute.xlu0 %1071
        %1073 = vrot.lane.b32.xlu0 %v250, 109
        %v1074 = vpop.permute.xlu0 %1073
        %1075 = vrot.lane.b32.xlu0 %v251, 109
        %v1076 = vpop.permute.xlu0 %1075
        %1077 = vrot.lane.b32.xlu0 %v252, 109
        %v1078 = vpop.permute.xlu0 %1077
        %1079 = vrot.lane.b32.xlu0 %v253, 109
        %v1080 = vpop.permute.xlu0 %1079
        %1081 = vrot.lane.b32.xlu0 %v254, 109
        %v1082 = vpop.permute.xlu0 %1081
        %vm1083 = vcmask 891904
        %v1084 = vsel %vm1083, %v1060, %v1062
        %v1085 = vsel %vm1083, %v1062, %v1064
        %v1086 = vsel %vm1083, %v1066, %v1068
        %v1087 = vsel %vm1083, %v1068, %v1070
        %v1088 = vsel %vm1083, %v1072, %v1074
        %v1089 = vsel %vm1083, %v1074, %v1076
        %v1090 = vsel %vm1083, %v1078, %v1080
        %v1091 = vsel %vm1083, %v1080, %v1082
        %v1105 = vsel %vm315, %v1057, 0
        %v1108 = vsel %vm315, %v1058, 0
        %1110 = vmatprep.subr.mxu0 0.0
        %1111 = vmatpush1.msra.mxu0 0.0
        %1112 = vmatprep.subr.mxu0 0.0
        %1113 = vmatpush1.msra.mxu0 0.0
        %1114 = vmatprep.subr.mxu0 0.0
        %1115 = vmatpush1.msra.mxu0 0.0
        %1116 = vmatprep.subr.mxu0 0.0
        %1117 = vmatpush1.msra.mxu0 0.0
        %1118 = vmatprep.subr.mxu0 0.0
        %1119 = vmatpush1.msra.mxu0 0.0
        %1120 = vmatprep.subr.mxu0 0.0
        %1121 = vmatpush1.msra.mxu0 0.0
        %1122 = vmatprep.subr.mxu0 0.0
        %1123 = vmatpush1.msra.mxu0 0.0
        %1124 = vmatprep.subr.mxu0 0.0
        %1125 = vmatpush1.msra.mxu0 0.0
        %1126 = vmatprep.subr.mxu0 0.0
        %1127 = vmatpush1.msra.mxu0 0.0
        %1128 = vmatprep.subr.mxu0 0.0
        %1129 = vmatpush1.msra.mxu0 0.0
        %1130 = vmatprep.subr.mxu0 0.0
        %1131 = vmatpush1.msra.mxu0 0.0
        %1132 = vmatprep.subr.mxu0 0.0
        %1133 = vmatpush1.msra.mxu0 0.0
        %1134 = vmatprep.subr.mxu0 %v1091
        %1135 = vmatpush1.msra.mxu0 %v1090
        %1136 = vmatprep.subr.mxu0 %v1089
        %1137 = vmatpush1.msra.mxu0 %v1088
        %1138 = vmatprep.subr.mxu0 %v1087
        %1139 = vmatpush1.msra.mxu0 %v1086
        %1140 = vmatprep.subr.mxu0 %v1085
        %1141 = vmatpush1.msra.mxu0 %v1084
        %1142 = vmatprep.subr.mxu0 0.0
        %1143 = vmatpush2.msra.mxu0 0.0
        %1144 = vmatprep.subr.mxu0 0.0
        %1145 = vmatpush2.msra.mxu0 0.0
        %1146 = vmatprep.subr.mxu0 0.0
        %1147 = vmatpush2.msra.mxu0 0.0
        %1148 = vmatprep.subr.mxu0 0.0
        %1149 = vmatpush2.msra.mxu0 0.0
        %1150 = vmatprep.subr.mxu0 0.0
        %1151 = vmatpush2.msra.mxu0 0.0
        %1152 = vmatprep.subr.mxu0 0.0
        %1153 = vmatpush2.msra.mxu0 0.0
        %1154 = vmatprep.subr.mxu0 0.0
        %1155 = vmatpush2.msra.mxu0 0.0
        %1156 = vmatprep.subr.mxu0 0.0
        %1157 = vmatpush2.msra.mxu0 0.0
        %1158 = vmatprep.subr.mxu0 0.0
        %1159 = vmatpush2.msra.mxu0 0.0
        %1160 = vmatprep.subr.mxu0 0.0
        %1161 = vmatpush2.msra.mxu0 0.0
        %1162 = vmatprep.subr.mxu0 0.0
        %1163 = vmatpush2.msra.mxu0 0.0
        %1164 = vmatprep.subr.mxu0 0.0
        %1165 = vmatpush2.msra.mxu0 0.0
        %1166 = vmatprep.subr.mxu0 0.0
        %1167 = vmatpush2.msra.mxu0 0.0
        %1168 = vmatprep.subr.mxu0 0.0
        %1169 = vmatpush2.msra.mxu0 0.0
        %1170 = vmatprep.subr.mxu0 0.0
        %1171 = vmatpush2.msra.mxu0 0.0
        %1172 = vmatprep.subr.mxu0 0.0
        %1173 = vmatpush2.msra.mxu0 0.0
        %1174 = vmatprep.mubr.f32.mxu0 0.0
        %1175 = vmatmul.mubr.f32.gmra.mxu0 %v1105
        %v1176 = vpop.f32.mrf.mxu0
        %v1177 = vadd.f32 0.0, %v1176
        %v1178 = vpop.f32.mrf.mxu0
        %v1179 = vadd.f32 0.0, %v1178
        %1180 = vmatprep.mubr.f32.mxu0 0.0
        %1181 = vmatmul.mubr.f32.gmra.mxu0 %v1108
        %v1182 = vpop.f32.mrf.mxu0
        %v1183 = vadd.f32 0.0, %v1182
        %v1184 = vpop.f32.mrf.mxu0
        %v1185 = vadd.f32 0.0, %v1184
        %1186 = vdwg.mxu0
        %1187 = vmatprep.subr.mxu0 0.0
        %1188 = vmatpush1.msra.mxu0 0.0
        %1189 = vmatprep.subr.mxu0 0.0
        %1190 = vmatpush1.msra.mxu0 0.0
        %1191 = vmatprep.subr.mxu0 0.0
        %1192 = vmatpush1.msra.mxu0 0.0
        %1193 = vmatprep.subr.mxu0 0.0
        %1194 = vmatpush1.msra.mxu0 0.0
        %1195 = vmatprep.subr.mxu0 0.0
        %1196 = vmatpush1.msra.mxu0 0.0
        %1197 = vmatprep.subr.mxu0 0.0
        %1198 = vmatpush1.msra.mxu0 0.0
        %1199 = vmatprep.subr.mxu0 0.0
        %1200 = vmatpush1.msra.mxu0 0.0
        %1201 = vmatprep.subr.mxu0 0.0
        %1202 = vmatpush1.msra.mxu0 0.0
        %1203 = vmatprep.subr.mxu0 0.0
        %1204 = vmatpush1.msra.mxu0 0.0
        %1205 = vmatprep.subr.mxu0 0.0
        %1206 = vmatpush1.msra.mxu0 0.0
        %1207 = vmatprep.subr.mxu0 0.0
        %1208 = vmatpush1.msra.mxu0 0.0
        %1209 = vmatprep.subr.mxu0 0.0
        %1210 = vmatpush1.msra.mxu0 0.0
        %1211 = vmatprep.subr.mxu0 0.0
        %1212 = vmatpush1.msra.mxu0 %v1082
        %1213 = vmatprep.subr.mxu0 0.0
        %1214 = vmatpush1.msra.mxu0 %v1076
        %1215 = vmatprep.subr.mxu0 0.0
        %1216 = vmatpush1.msra.mxu0 %v1070
        %1217 = vmatprep.subr.mxu0 0.0
        %1218 = vmatpush1.msra.mxu0 %v1064
        %1219 = vmatprep.subr.mxu0 0.0
        %1220 = vmatpush2.msra.mxu0 0.0
        %1221 = vmatprep.subr.mxu0 0.0
        %1222 = vmatpush2.msra.mxu0 0.0
        %1223 = vmatprep.subr.mxu0 0.0
        %1224 = vmatpush2.msra.mxu0 0.0
        %1225 = vmatprep.subr.mxu0 0.0
        %1226 = vmatpush2.msra.mxu0 0.0
        %1227 = vmatprep.subr.mxu0 0.0
        %1228 = vmatpush2.msra.mxu0 0.0
        %1229 = vmatprep.subr.mxu0 0.0
        %1230 = vmatpush2.msra.mxu0 0.0
        %1231 = vmatprep.subr.mxu0 0.0
        %1232 = vmatpush2.msra.mxu0 0.0
        %1233 = vmatprep.subr.mxu0 0.0
        %1234 = vmatpush2.msra.mxu0 0.0
        %1235 = vmatprep.subr.mxu0 0.0
        %1236 = vmatpush2.msra.mxu0 0.0
        %1237 = vmatprep.subr.mxu0 0.0
        %1238 = vmatpush2.msra.mxu0 0.0
        %1239 = vmatprep.subr.mxu0 0.0
        %1240 = vmatpush2.msra.mxu0 0.0
        %1241 = vmatprep.subr.mxu0 0.0
        %1242 = vmatpush2.msra.mxu0 0.0
        %1243 = vmatprep.subr.mxu0 0.0
        %1244 = vmatpush2.msra.mxu0 0.0
        %1245 = vmatprep.subr.mxu0 0.0
        %1246 = vmatpush2.msra.mxu0 0.0
        %1247 = vmatprep.subr.mxu0 0.0
        %1248 = vmatpush2.msra.mxu0 0.0
        %1249 = vmatprep.subr.mxu0 0.0
        %1250 = vmatpush2.msra.mxu0 0.0
        %1251 = vmatprep.mubr.f32.mxu0 0.0
        %1252 = vmatmul.mubr.f32.gmra.mxu0 %v1105
        %v1253 = vpop.f32.mrf.mxu0
        %v1254 = vadd.f32 0.0, %v1253
        %v1255 = vpop.f32.mrf.mxu0
        %1256 = vmatprep.mubr.f32.mxu0 0.0
        %1257 = vmatmul.mubr.f32.gmra.mxu0 %v1108
        %v1258 = vpop.f32.mrf.mxu0
        %v1259 = vadd.f32 0.0, %v1258
        %v1260 = vpop.f32.mrf.mxu0
        %1261 = vdwg.mxu0
        %v1262 = vadd.f32 %v1050, %v1177
        %v1263 = vadd.f32 %v1051, %v1179
        %v1264 = vadd.f32 %v1052, %v1254
        %v1265 = vadd.f32 %v1053, %v1183
        %v1266 = vadd.f32 %v1054, %v1185
        %v1267 = vadd.f32 %v1055, %v1259
        %s1268 = scalar_lea.vmem [#allocation6], 80
        %v1269 = vld [vmem:[%s1268] sm:$0xff]
        %v1270 = vld [vmem:[%s1268 + $0x8] sm:$0xff]
        %1271 = vrot.lane.b32.xlu0 %v243, 108
        %v1272 = vpop.permute.xlu0 %1271
        %1273 = vrot.lane.b32.xlu0 %v244, 108
        %v1274 = vpop.permute.xlu0 %1273
        %1275 = vrot.lane.b32.xlu0 %v245, 108
        %v1276 = vpop.permute.xlu0 %1275
        %1277 = vrot.lane.b32.xlu0 %v246, 108
        %v1278 = vpop.permute.xlu0 %1277
        %1279 = vrot.lane.b32.xlu0 %v247, 108
        %v1280 = vpop.permute.xlu0 %1279
        %1281 = vrot.lane.b32.xlu0 %v248, 108
        %v1282 = vpop.permute.xlu0 %1281
        %1283 = vrot.lane.b32.xlu0 %v249, 108
        %v1284 = vpop.permute.xlu0 %1283
        %1285 = vrot.lane.b32.xlu0 %v250, 108
        %v1286 = vpop.permute.xlu0 %1285
        %1287 = vrot.lane.b32.xlu0 %v251, 108
        %v1288 = vpop.permute.xlu0 %1287
        %1289 = vrot.lane.b32.xlu0 %v252, 108
        %v1290 = vpop.permute.xlu0 %1289
        %1291 = vrot.lane.b32.xlu0 %v253, 108
        %v1292 = vpop.permute.xlu0 %1291
        %1293 = vrot.lane.b32.xlu0 %v254, 108
        %v1294 = vpop.permute.xlu0 %1293
        %vm1295 = vcmask 883712
        %v1296 = vsel %vm1295, %v1272, %v1274
        %v1297 = vsel %vm1295, %v1274, %v1276
        %v1298 = vsel %vm1295, %v1278, %v1280
        %v1299 = vsel %vm1295, %v1280, %v1282
        %v1300 = vsel %vm1295, %v1284, %v1286
        %v1301 = vsel %vm1295, %v1286, %v1288
        %v1302 = vsel %vm1295, %v1290, %v1292
        %v1303 = vsel %vm1295, %v1292, %v1294
        %v1317 = vsel %vm315, %v1269, 0
        %v1320 = vsel %vm315, %v1270, 0
        %1322 = vmatprep.subr.mxu0 0.0
        %1323 = vmatpush1.msra.mxu0 0.0
        %1324 = vmatprep.subr.mxu0 0.0
        %1325 = vmatpush1.msra.mxu0 0.0
        %1326 = vmatprep.subr.mxu0 0.0
        %1327 = vmatpush1.msra.mxu0 0.0
        %1328 = vmatprep.subr.mxu0 0.0
        %1329 = vmatpush1.msra.mxu0 0.0
        %1330 = vmatprep.subr.mxu0 0.0
        %1331 = vmatpush1.msra.mxu0 0.0
        %1332 = vmatprep.subr.mxu0 0.0
        %1333 = vmatpush1.msra.mxu0 0.0
        %1334 = vmatprep.subr.mxu0 0.0
        %1335 = vmatpush1.msra.mxu0 0.0
        %1336 = vmatprep.subr.mxu0 0.0
        %1337 = vmatpush1.msra.mxu0 0.0
        %1338 = vmatprep.subr.mxu0 0.0
        %1339 = vmatpush1.msra.mxu0 0.0
        %1340 = vmatprep.subr.mxu0 0.0
        %1341 = vmatpush1.msra.mxu0 0.0
        %1342 = vmatprep.subr.mxu0 0.0
        %1343 = vmatpush1.msra.mxu0 0.0
        %1344 = vmatprep.subr.mxu0 0.0
        %1345 = vmatpush1.msra.mxu0 0.0
        %1346 = vmatprep.subr.mxu0 %v1303
        %1347 = vmatpush1.msra.mxu0 %v1302
        %1348 = vmatprep.subr.mxu0 %v1301
        %1349 = vmatpush1.msra.mxu0 %v1300
        %1350 = vmatprep.subr.mxu0 %v1299
        %1351 = vmatpush1.msra.mxu0 %v1298
        %1352 = vmatprep.subr.mxu0 %v1297
        %1353 = vmatpush1.msra.mxu0 %v1296
        %1354 = vmatprep.subr.mxu0 0.0
        %1355 = vmatpush2.msra.mxu0 0.0
        %1356 = vmatprep.subr.mxu0 0.0
        %1357 = vmatpush2.msra.mxu0 0.0
        %1358 = vmatprep.subr.mxu0 0.0
        %1359 = vmatpush2.msra.mxu0 0.0
        %1360 = vmatprep.subr.mxu0 0.0
        %1361 = vmatpush2.msra.mxu0 0.0
        %1362 = vmatprep.subr.mxu0 0.0
        %1363 = vmatpush2.msra.mxu0 0.0
        %1364 = vmatprep.subr.mxu0 0.0
        %1365 = vmatpush2.msra.mxu0 0.0
        %1366 = vmatprep.subr.mxu0 0.0
        %1367 = vmatpush2.msra.mxu0 0.0
        %1368 = vmatprep.subr.mxu0 0.0
        %1369 = vmatpush2.msra.mxu0 0.0
        %1370 = vmatprep.subr.mxu0 0.0
        %1371 = vmatpush2.msra.mxu0 0.0
        %1372 = vmatprep.subr.mxu0 0.0
        %1373 = vmatpush2.msra.mxu0 0.0
        %1374 = vmatprep.subr.mxu0 0.0
        %1375 = vmatpush2.msra.mxu0 0.0
        %1376 = vmatprep.subr.mxu0 0.0
        %1377 = vmatpush2.msra.mxu0 0.0
        %1378 = vmatprep.subr.mxu0 0.0
        %1379 = vmatpush2.msra.mxu0 0.0
        %1380 = vmatprep.subr.mxu0 0.0
        %1381 = vmatpush2.msra.mxu0 0.0
        %1382 = vmatprep.subr.mxu0 0.0
        %1383 = vmatpush2.msra.mxu0 0.0
        %1384 = vmatprep.subr.mxu0 0.0
        %1385 = vmatpush2.msra.mxu0 0.0
        %1386 = vmatprep.mubr.f32.mxu0 0.0
        %1387 = vmatmul.mubr.f32.gmra.mxu0 %v1317
        %v1388 = vpop.f32.mrf.mxu0
        %v1389 = vadd.f32 0.0, %v1388
        %v1390 = vpop.f32.mrf.mxu0
        %v1391 = vadd.f32 0.0, %v1390
        %1392 = vmatprep.mubr.f32.mxu0 0.0
        %1393 = vmatmul.mubr.f32.gmra.mxu0 %v1320
        %v1394 = vpop.f32.mrf.mxu0
        %v1395 = vadd.f32 0.0, %v1394
        %v1396 = vpop.f32.mrf.mxu0
        %v1397 = vadd.f32 0.0, %v1396
        %1398 = vdwg.mxu0
        %1399 = vmatprep.subr.mxu0 0.0
        %1400 = vmatpush1.msra.mxu0 0.0
        %1401 = vmatprep.subr.mxu0 0.0
        %1402 = vmatpush1.msra.mxu0 0.0
        %1403 = vmatprep.subr.mxu0 0.0
        %1404 = vmatpush1.msra.mxu0 0.0
        %1405 = vmatprep.subr.mxu0 0.0
        %1406 = vmatpush1.msra.mxu0 0.0
        %1407 = vmatprep.subr.mxu0 0.0
        %1408 = vmatpush1.msra.mxu0 0.0
        %1409 = vmatprep.subr.mxu0 0.0
        %1410 = vmatpush1.msra.mxu0 0.0
        %1411 = vmatprep.subr.mxu0 0.0
        %1412 = vmatpush1.msra.mxu0 0.0
        %1413 = vmatprep.subr.mxu0 0.0
        %1414 = vmatpush1.msra.mxu0 0.0
        %1415 = vmatprep.subr.mxu0 0.0
        %1416 = vmatpush1.msra.mxu0 0.0
        %1417 = vmatprep.subr.mxu0 0.0
        %1418 = vmatpush1.msra.mxu0 0.0
        %1419 = vmatprep.subr.mxu0 0.0
        %1420 = vmatpush1.msra.mxu0 0.0
        %1421 = vmatprep.subr.mxu0 0.0
        %1422 = vmatpush1.msra.mxu0 0.0
        %1423 = vmatprep.subr.mxu0 0.0
        %1424 = vmatpush1.msra.mxu0 %v1294
        %1425 = vmatprep.subr.mxu0 0.0
        %1426 = vmatpush1.msra.mxu0 %v1288
        %1427 = vmatprep.subr.mxu0 0.0
        %1428 = vmatpush1.msra.mxu0 %v1282
        %1429 = vmatprep.subr.mxu0 0.0
        %1430 = vmatpush1.msra.mxu0 %v1276
        %1431 = vmatprep.subr.mxu0 0.0
        %1432 = vmatpush2.msra.mxu0 0.0
        %1433 = vmatprep.subr.mxu0 0.0
        %1434 = vmatpush2.msra.mxu0 0.0
        %1435 = vmatprep.subr.mxu0 0.0
        %1436 = vmatpush2.msra.mxu0 0.0
        %1437 = vmatprep.subr.mxu0 0.0
        %1438 = vmatpush2.msra.mxu0 0.0
        %1439 = vmatprep.subr.mxu0 0.0
        %1440 = vmatpush2.msra.mxu0 0.0
        %1441 = vmatprep.subr.mxu0 0.0
        %1442 = vmatpush2.msra.mxu0 0.0
        %1443 = vmatprep.subr.mxu0 0.0
        %1444 = vmatpush2.msra.mxu0 0.0
        %1445 = vmatprep.subr.mxu0 0.0
        %1446 = vmatpush2.msra.mxu0 0.0
        %1447 = vmatprep.subr.mxu0 0.0
        %1448 = vmatpush2.msra.mxu0 0.0
        %1449 = vmatprep.subr.mxu0 0.0
        %1450 = vmatpush2.msra.mxu0 0.0
        %1451 = vmatprep.subr.mxu0 0.0
        %1452 = vmatpush2.msra.mxu0 0.0
        %1453 = vmatprep.subr.mxu0 0.0
        %1454 = vmatpush2.msra.mxu0 0.0
        %1455 = vmatprep.subr.mxu0 0.0
        %1456 = vmatpush2.msra.mxu0 0.0
        %1457 = vmatprep.subr.mxu0 0.0
        %1458 = vmatpush2.msra.mxu0 0.0
        %1459 = vmatprep.subr.mxu0 0.0
        %1460 = vmatpush2.msra.mxu0 0.0
        %1461 = vmatprep.subr.mxu0 0.0
        %1462 = vmatpush2.msra.mxu0 0.0
        %1463 = vmatprep.mubr.f32.mxu0 0.0
        %1464 = vmatmul.mubr.f32.gmra.mxu0 %v1317
        %v1465 = vpop.f32.mrf.mxu0
        %v1466 = vadd.f32 0.0, %v1465
        %v1467 = vpop.f32.mrf.mxu0
        %1468 = vmatprep.mubr.f32.mxu0 0.0
        %1469 = vmatmul.mubr.f32.gmra.mxu0 %v1320
        %v1470 = vpop.f32.mrf.mxu0
        %v1471 = vadd.f32 0.0, %v1470
        %v1472 = vpop.f32.mrf.mxu0
        %1473 = vdwg.mxu0
        %v1474 = vadd.f32 %v1262, %v1389
        %v1475 = vadd.f32 %v1263, %v1391
        %v1476 = vadd.f32 %v1264, %v1466
        %v1477 = vadd.f32 %v1265, %v1395
        %v1478 = vadd.f32 %v1266, %v1397
        %v1479 = vadd.f32 %v1267, %v1471
        %s1480 = scalar_lea.vmem [#allocation6], 96
        %v1481 = vld [vmem:[%s1480] sm:$0xff]
        %v1482 = vld [vmem:[%s1480 + $0x8] sm:$0xff]
        %1483 = vrot.lane.b32.xlu0 %v243, 92
        %v1484 = vpop.permute.xlu0 %1483
        %1485 = vrot.lane.b32.xlu0 %v244, 92
        %v1486 = vpop.permute.xlu0 %1485
        %1487 = vrot.lane.b32.xlu0 %v245, 92
        %v1488 = vpop.permute.xlu0 %1487
        %1489 = vrot.lane.b32.xlu0 %v246, 92
        %v1490 = vpop.permute.xlu0 %1489
        %1491 = vrot.lane.b32.xlu0 %v247, 92
        %v1492 = vpop.permute.xlu0 %1491
        %1493 = vrot.lane.b32.xlu0 %v248, 92
        %v1494 = vpop.permute.xlu0 %1493
        %1495 = vrot.lane.b32.xlu0 %v249, 92
        %v1496 = vpop.permute.xlu0 %1495
        %1497 = vrot.lane.b32.xlu0 %v250, 92
        %v1498 = vpop.permute.xlu0 %1497
        %1499 = vrot.lane.b32.xlu0 %v251, 92
        %v1500 = vpop.permute.xlu0 %1499
        %1501 = vrot.lane.b32.xlu0 %v252, 92
        %v1502 = vpop.permute.xlu0 %1501
        %1503 = vrot.lane.b32.xlu0 %v253, 92
        %v1504 = vpop.permute.xlu0 %1503
        %1505 = vrot.lane.b32.xlu0 %v254, 92
        %v1506 = vpop.permute.xlu0 %1505
        %vm1507 = vcmask 752640
        %v1508 = vsel %vm1507, %v1484, %v1486
        %v1509 = vsel %vm1507, %v1486, %v1488
        %v1510 = vsel %vm1507, %v1490, %v1492
        %v1511 = vsel %vm1507, %v1492, %v1494
        %v1512 = vsel %vm1507, %v1496, %v1498
        %v1513 = vsel %vm1507, %v1498, %v1500
        %v1514 = vsel %vm1507, %v1502, %v1504
        %v1515 = vsel %vm1507, %v1504, %v1506
        %v1529 = vsel %vm315, %v1481, 0
        %v1532 = vsel %vm315, %v1482, 0
        %1534 = vmatprep.subr.mxu0 0.0
        %1535 = vmatpush1.msra.mxu0 0.0
        %1536 = vmatprep.subr.mxu0 0.0
        %1537 = vmatpush1.msra.mxu0 0.0
        %1538 = vmatprep.subr.mxu0 0.0
        %1539 = vmatpush1.msra.mxu0 0.0
        %1540 = vmatprep.subr.mxu0 0.0
        %1541 = vmatpush1.msra.mxu0 0.0
        %1542 = vmatprep.subr.mxu0 0.0
        %1543 = vmatpush1.msra.mxu0 0.0
        %1544 = vmatprep.subr.mxu0 0.0
        %1545 = vmatpush1.msra.mxu0 0.0
        %1546 = vmatprep.subr.mxu0 0.0
        %1547 = vmatpush1.msra.mxu0 0.0
        %1548 = vmatprep.subr.mxu0 0.0
        %1549 = vmatpush1.msra.mxu0 0.0
        %1550 = vmatprep.subr.mxu0 0.0
        %1551 = vmatpush1.msra.mxu0 0.0
        %1552 = vmatprep.subr.mxu0 0.0
        %1553 = vmatpush1.msra.mxu0 0.0
        %1554 = vmatprep.subr.mxu0 0.0
        %1555 = vmatpush1.msra.mxu0 0.0
        %1556 = vmatprep.subr.mxu0 0.0
        %1557 = vmatpush1.msra.mxu0 0.0
        %1558 = vmatprep.subr.mxu0 %v1515
        %1559 = vmatpush1.msra.mxu0 %v1514
        %1560 = vmatprep.subr.mxu0 %v1513
        %1561 = vmatpush1.msra.mxu0 %v1512
        %1562 = vmatprep.subr.mxu0 %v1511
        %1563 = vmatpush1.msra.mxu0 %v1510
        %1564 = vmatprep.subr.mxu0 %v1509
        %1565 = vmatpush1.msra.mxu0 %v1508
        %1566 = vmatprep.subr.mxu0 0.0
        %1567 = vmatpush2.msra.mxu0 0.0
        %1568 = vmatprep.subr.mxu0 0.0
        %1569 = vmatpush2.msra.mxu0 0.0
        %1570 = vmatprep.subr.mxu0 0.0
        %1571 = vmatpush2.msra.mxu0 0.0
        %1572 = vmatprep.subr.mxu0 0.0
        %1573 = vmatpush2.msra.mxu0 0.0
        %1574 = vmatprep.subr.mxu0 0.0
        %1575 = vmatpush2.msra.mxu0 0.0
        %1576 = vmatprep.subr.mxu0 0.0
        %1577 = vmatpush2.msra.mxu0 0.0
        %1578 = vmatprep.subr.mxu0 0.0
        %1579 = vmatpush2.msra.mxu0 0.0
        %1580 = vmatprep.subr.mxu0 0.0
        %1581 = vmatpush2.msra.mxu0 0.0
        %1582 = vmatprep.subr.mxu0 0.0
        %1583 = vmatpush2.msra.mxu0 0.0
        %1584 = vmatprep.subr.mxu0 0.0
        %1585 = vmatpush2.msra.mxu0 0.0
        %1586 = vmatprep.subr.mxu0 0.0
        %1587 = vmatpush2.msra.mxu0 0.0
        %1588 = vmatprep.subr.mxu0 0.0
        %1589 = vmatpush2.msra.mxu0 0.0
        %1590 = vmatprep.subr.mxu0 0.0
        %1591 = vmatpush2.msra.mxu0 0.0
        %1592 = vmatprep.subr.mxu0 0.0
        %1593 = vmatpush2.msra.mxu0 0.0
        %1594 = vmatprep.subr.mxu0 0.0
        %1595 = vmatpush2.msra.mxu0 0.0
        %1596 = vmatprep.subr.mxu0 0.0
        %1597 = vmatpush2.msra.mxu0 0.0
        %1598 = vmatprep.mubr.f32.mxu0 0.0
        %1599 = vmatmul.mubr.f32.gmra.mxu0 %v1529
        %v1600 = vpop.f32.mrf.mxu0
        %v1601 = vadd.f32 0.0, %v1600
        %v1602 = vpop.f32.mrf.mxu0
        %v1603 = vadd.f32 0.0, %v1602
        %1604 = vmatprep.mubr.f32.mxu0 0.0
        %1605 = vmatmul.mubr.f32.gmra.mxu0 %v1532
        %v1606 = vpop.f32.mrf.mxu0
        %v1607 = vadd.f32 0.0, %v1606
        %v1608 = vpop.f32.mrf.mxu0
        %v1609 = vadd.f32 0.0, %v1608
        %1610 = vdwg.mxu0
        %1611 = vmatprep.subr.mxu0 0.0
        %1612 = vmatpush1.msra.mxu0 0.0
        %1613 = vmatprep.subr.mxu0 0.0
        %1614 = vmatpush1.msra.mxu0 0.0
        %1615 = vmatprep.subr.mxu0 0.0
        %1616 = vmatpush1.msra.mxu0 0.0
        %1617 = vmatprep.subr.mxu0 0.0
        %1618 = vmatpush1.msra.mxu0 0.0
        %1619 = vmatprep.subr.mxu0 0.0
        %1620 = vmatpush1.msra.mxu0 0.0
        %1621 = vmatprep.subr.mxu0 0.0
        %1622 = vmatpush1.msra.mxu0 0.0
        %1623 = vmatprep.subr.mxu0 0.0
        %1624 = vmatpush1.msra.mxu0 0.0
        %1625 = vmatprep.subr.mxu0 0.0
        %1626 = vmatpush1.msra.mxu0 0.0
        %1627 = vmatprep.subr.mxu0 0.0
        %1628 = vmatpush1.msra.mxu0 0.0
        %1629 = vmatprep.subr.mxu0 0.0
        %1630 = vmatpush1.msra.mxu0 0.0
        %1631 = vmatprep.subr.mxu0 0.0
        %1632 = vmatpush1.msra.mxu0 0.0
        %1633 = vmatprep.subr.mxu0 0.0
        %1634 = vmatpush1.msra.mxu0 0.0
        %1635 = vmatprep.subr.mxu0 0.0
        %1636 = vmatpush1.msra.mxu0 %v1506
        %1637 = vmatprep.subr.mxu0 0.0
        %1638 = vmatpush1.msra.mxu0 %v1500
        %1639 = vmatprep.subr.mxu0 0.0
        %1640 = vmatpush1.msra.mxu0 %v1494
        %1641 = vmatprep.subr.mxu0 0.0
        %1642 = vmatpush1.msra.mxu0 %v1488
        %1643 = vmatprep.subr.mxu0 0.0
        %1644 = vmatpush2.msra.mxu0 0.0
        %1645 = vmatprep.subr.mxu0 0.0
        %1646 = vmatpush2.msra.mxu0 0.0
        %1647 = vmatprep.subr.mxu0 0.0
        %1648 = vmatpush2.msra.mxu0 0.0
        %1649 = vmatprep.subr.mxu0 0.0
        %1650 = vmatpush2.msra.mxu0 0.0
        %1651 = vmatprep.subr.mxu0 0.0
        %1652 = vmatpush2.msra.mxu0 0.0
        %1653 = vmatprep.subr.mxu0 0.0
        %1654 = vmatpush2.msra.mxu0 0.0
        %1655 = vmatprep.subr.mxu0 0.0
        %1656 = vmatpush2.msra.mxu0 0.0
        %1657 = vmatprep.subr.mxu0 0.0
        %1658 = vmatpush2.msra.mxu0 0.0
        %1659 = vmatprep.subr.mxu0 0.0
        %1660 = vmatpush2.msra.mxu0 0.0
        %1661 = vmatprep.subr.mxu0 0.0
        %1662 = vmatpush2.msra.mxu0 0.0
        %1663 = vmatprep.subr.mxu0 0.0
        %1664 = vmatpush2.msra.mxu0 0.0
        %1665 = vmatprep.subr.mxu0 0.0
        %1666 = vmatpush2.msra.mxu0 0.0
        %1667 = vmatprep.subr.mxu0 0.0
        %1668 = vmatpush2.msra.mxu0 0.0
        %1669 = vmatprep.subr.mxu0 0.0
        %1670 = vmatpush2.msra.mxu0 0.0
        %1671 = vmatprep.subr.mxu0 0.0
        %1672 = vmatpush2.msra.mxu0 0.0
        %1673 = vmatprep.subr.mxu0 0.0
        %1674 = vmatpush2.msra.mxu0 0.0
        %1675 = vmatprep.mubr.f32.mxu0 0.0
        %1676 = vmatmul.mubr.f32.gmra.mxu0 %v1529
        %v1677 = vpop.f32.mrf.mxu0
        %v1678 = vadd.f32 0.0, %v1677
        %v1679 = vpop.f32.mrf.mxu0
        %1680 = vmatprep.mubr.f32.mxu0 0.0
        %1681 = vmatmul.mubr.f32.gmra.mxu0 %v1532
        %v1682 = vpop.f32.mrf.mxu0
        %v1683 = vadd.f32 0.0, %v1682
        %v1684 = vpop.f32.mrf.mxu0
        %1685 = vdwg.mxu0
        %v1686 = vadd.f32 %v1474, %v1601
        %v1687 = vadd.f32 %v1475, %v1603
        %v1688 = vadd.f32 %v1476, %v1678
        %v1689 = vadd.f32 %v1477, %v1607
        %v1690 = vadd.f32 %v1478, %v1609
        %v1691 = vadd.f32 %v1479, %v1683
        %s1692 = scalar_lea.vmem [#allocation6], 112
        %v1693 = vld [vmem:[%s1692] sm:$0xff]
        %v1694 = vld [vmem:[%s1692 + $0x8] sm:$0xff]
        %1695 = vrot.lane.b32.xlu0 %v243, 91
        %v1696 = vpop.permute.xlu0 %1695
        %1697 = vrot.lane.b32.xlu0 %v244, 91
        %v1698 = vpop.permute.xlu0 %1697
        %1699 = vrot.lane.b32.xlu0 %v245, 91
        %v1700 = vpop.permute.xlu0 %1699
        %1701 = vrot.lane.b32.xlu0 %v246, 91
        %v1702 = vpop.permute.xlu0 %1701
        %1703 = vrot.lane.b32.xlu0 %v247, 91
        %v1704 = vpop.permute.xlu0 %1703
        %1705 = vrot.lane.b32.xlu0 %v248, 91
        %v1706 = vpop.permute.xlu0 %1705
        %1707 = vrot.lane.b32.xlu0 %v249, 91
        %v1708 = vpop.permute.xlu0 %1707
        %1709 = vrot.lane.b32.xlu0 %v250, 91
        %v1710 = vpop.permute.xlu0 %1709
        %1711 = vrot.lane.b32.xlu0 %v251, 91
        %v1712 = vpop.permute.xlu0 %1711
        %1713 = vrot.lane.b32.xlu0 %v252, 91
        %v1714 = vpop.permute.xlu0 %1713
        %1715 = vrot.lane.b32.xlu0 %v253, 91
        %v1716 = vpop.permute.xlu0 %1715
        %1717 = vrot.lane.b32.xlu0 %v254, 91
        %v1718 = vpop.permute.xlu0 %1717
        %vm1719 = vcmask 744448
        %v1720 = vsel %vm1719, %v1696, %v1698
        %v1721 = vsel %vm1719, %v1698, %v1700
        %v1722 = vsel %vm1719, %v1702, %v1704
        %v1723 = vsel %vm1719, %v1704, %v1706
        %v1724 = vsel %vm1719, %v1708, %v1710
        %v1725 = vsel %vm1719, %v1710, %v1712
        %v1726 = vsel %vm1719, %v1714, %v1716
        %v1727 = vsel %vm1719, %v1716, %v1718
        %v1741 = vsel %vm315, %v1693, 0
        %v1744 = vsel %vm315, %v1694, 0
        %1746 = vmatprep.subr.mxu0 0.0
        %1747 = vmatpush1.msra.mxu0 0.0
        %1748 = vmatprep.subr.mxu0 0.0
        %1749 = vmatpush1.msra.mxu0 0.0
        %1750 = vmatprep.subr.mxu0 0.0
        %1751 = vmatpush1.msra.mxu0 0.0
        %1752 = vmatprep.subr.mxu0 0.0
        %1753 = vmatpush1.msra.mxu0 0.0
        %1754 = vmatprep.subr.mxu0 0.0
        %1755 = vmatpush1.msra.mxu0 0.0
        %1756 = vmatprep.subr.mxu0 0.0
        %1757 = vmatpush1.msra.mxu0 0.0
        %1758 = vmatprep.subr.mxu0 0.0
        %1759 = vmatpush1.msra.mxu0 0.0
        %1760 = vmatprep.subr.mxu0 0.0
        %1761 = vmatpush1.msra.mxu0 0.0
        %1762 = vmatprep.subr.mxu0 0.0
        %1763 = vmatpush1.msra.mxu0 0.0
        %1764 = vmatprep.subr.mxu0 0.0
        %1765 = vmatpush1.msra.mxu0 0.0
        %1766 = vmatprep.subr.mxu0 0.0
        %1767 = vmatpush1.msra.mxu0 0.0
        %1768 = vmatprep.subr.mxu0 0.0
        %1769 = vmatpush1.msra.mxu0 0.0
        %1770 = vmatprep.subr.mxu0 %v1727
        %1771 = vmatpush1.msra.mxu0 %v1726
        %1772 = vmatprep.subr.mxu0 %v1725
        %1773 = vmatpush1.msra.mxu0 %v1724
        %1774 = vmatprep.subr.mxu0 %v1723
        %1775 = vmatpush1.msra.mxu0 %v1722
        %1776 = vmatprep.subr.mxu0 %v1721
        %1777 = vmatpush1.msra.mxu0 %v1720
        %1778 = vmatprep.subr.mxu0 0.0
        %1779 = vmatpush2.msra.mxu0 0.0
        %1780 = vmatprep.subr.mxu0 0.0
        %1781 = vmatpush2.msra.mxu0 0.0
        %1782 = vmatprep.subr.mxu0 0.0
        %1783 = vmatpush2.msra.mxu0 0.0
        %1784 = vmatprep.subr.mxu0 0.0
        %1785 = vmatpush2.msra.mxu0 0.0
        %1786 = vmatprep.subr.mxu0 0.0
        %1787 = vmatpush2.msra.mxu0 0.0
        %1788 = vmatprep.subr.mxu0 0.0
        %1789 = vmatpush2.msra.mxu0 0.0
        %1790 = vmatprep.subr.mxu0 0.0
        %1791 = vmatpush2.msra.mxu0 0.0
        %1792 = vmatprep.subr.mxu0 0.0
        %1793 = vmatpush2.msra.mxu0 0.0
        %1794 = vmatprep.subr.mxu0 0.0
        %1795 = vmatpush2.msra.mxu0 0.0
        %1796 = vmatprep.subr.mxu0 0.0
        %1797 = vmatpush2.msra.mxu0 0.0
        %1798 = vmatprep.subr.mxu0 0.0
        %1799 = vmatpush2.msra.mxu0 0.0
        %1800 = vmatprep.subr.mxu0 0.0
        %1801 = vmatpush2.msra.mxu0 0.0
        %1802 = vmatprep.subr.mxu0 0.0
        %1803 = vmatpush2.msra.mxu0 0.0
        %1804 = vmatprep.subr.mxu0 0.0
        %1805 = vmatpush2.msra.mxu0 0.0
        %1806 = vmatprep.subr.mxu0 0.0
        %1807 = vmatpush2.msra.mxu0 0.0
        %1808 = vmatprep.subr.mxu0 0.0
        %1809 = vmatpush2.msra.mxu0 0.0
        %1810 = vmatprep.mubr.f32.mxu0 0.0
        %1811 = vmatmul.mubr.f32.gmra.mxu0 %v1741
        %v1812 = vpop.f32.mrf.mxu0
        %v1813 = vadd.f32 0.0, %v1812
        %v1814 = vpop.f32.mrf.mxu0
        %v1815 = vadd.f32 0.0, %v1814
        %1816 = vmatprep.mubr.f32.mxu0 0.0
        %1817 = vmatmul.mubr.f32.gmra.mxu0 %v1744
        %v1818 = vpop.f32.mrf.mxu0
        %v1819 = vadd.f32 0.0, %v1818
        %v1820 = vpop.f32.mrf.mxu0
        %v1821 = vadd.f32 0.0, %v1820
        %1822 = vdwg.mxu0
        %1823 = vmatprep.subr.mxu0 0.0
        %1824 = vmatpush1.msra.mxu0 0.0
        %1825 = vmatprep.subr.mxu0 0.0
        %1826 = vmatpush1.msra.mxu0 0.0
        %1827 = vmatprep.subr.mxu0 0.0
        %1828 = vmatpush1.msra.mxu0 0.0
        %1829 = vmatprep.subr.mxu0 0.0
        %1830 = vmatpush1.msra.mxu0 0.0
        %1831 = vmatprep.subr.mxu0 0.0
        %1832 = vmatpush1.msra.mxu0 0.0
        %1833 = vmatprep.subr.mxu0 0.0
        %1834 = vmatpush1.msra.mxu0 0.0
        %1835 = vmatprep.subr.mxu0 0.0
        %1836 = vmatpush1.msra.mxu0 0.0
        %1837 = vmatprep.subr.mxu0 0.0
        %1838 = vmatpush1.msra.mxu0 0.0
        %1839 = vmatprep.subr.mxu0 0.0
        %1840 = vmatpush1.msra.mxu0 0.0
        %1841 = vmatprep.subr.mxu0 0.0
        %1842 = vmatpush1.msra.mxu0 0.0
        %1843 = vmatprep.subr.mxu0 0.0
        %1844 = vmatpush1.msra.mxu0 0.0
        %1845 = vmatprep.subr.mxu0 0.0
        %1846 = vmatpush1.msra.mxu0 0.0
        %1847 = vmatprep.subr.mxu0 0.0
        %1848 = vmatpush1.msra.mxu0 %v1718
        %1849 = vmatprep.subr.mxu0 0.0
        %1850 = vmatpush1.msra.mxu0 %v1712
        %1851 = vmatprep.subr.mxu0 0.0
        %1852 = vmatpush1.msra.mxu0 %v1706
        %1853 = vmatprep.subr.mxu0 0.0
        %1854 = vmatpush1.msra.mxu0 %v1700
        %1855 = vmatprep.subr.mxu0 0.0
        %1856 = vmatpush2.msra.mxu0 0.0
        %1857 = vmatprep.subr.mxu0 0.0
        %1858 = vmatpush2.msra.mxu0 0.0
        %1859 = vmatprep.subr.mxu0 0.0
        %1860 = vmatpush2.msra.mxu0 0.0
        %1861 = vmatprep.subr.mxu0 0.0
        %1862 = vmatpush2.msra.mxu0 0.0
        %1863 = vmatprep.subr.mxu0 0.0
        %1864 = vmatpush2.msra.mxu0 0.0
        %1865 = vmatprep.subr.mxu0 0.0
        %1866 = vmatpush2.msra.mxu0 0.0
        %1867 = vmatprep.subr.mxu0 0.0
        %1868 = vmatpush2.msra.mxu0 0.0
        %1869 = vmatprep.subr.mxu0 0.0
        %1870 = vmatpush2.msra.mxu0 0.0
        %1871 = vmatprep.subr.mxu0 0.0
        %1872 = vmatpush2.msra.mxu0 0.0
        %1873 = vmatprep.subr.mxu0 0.0
        %1874 = vmatpush2.msra.mxu0 0.0
        %1875 = vmatprep.subr.mxu0 0.0
        %1876 = vmatpush2.msra.mxu0 0.0
        %1877 = vmatprep.subr.mxu0 0.0
        %1878 = vmatpush2.msra.mxu0 0.0
        %1879 = vmatprep.subr.mxu0 0.0
        %1880 = vmatpush2.msra.mxu0 0.0
        %1881 = vmatprep.subr.mxu0 0.0
        %1882 = vmatpush2.msra.mxu0 0.0
        %1883 = vmatprep.subr.mxu0 0.0
        %1884 = vmatpush2.msra.mxu0 0.0
        %1885 = vmatprep.subr.mxu0 0.0
        %1886 = vmatpush2.msra.mxu0 0.0
        %1887 = vmatprep.mubr.f32.mxu0 0.0
        %1888 = vmatmul.mubr.f32.gmra.mxu0 %v1741
        %v1889 = vpop.f32.mrf.mxu0
        %v1890 = vadd.f32 0.0, %v1889
        %v1891 = vpop.f32.mrf.mxu0
        %1892 = vmatprep.mubr.f32.mxu0 0.0
        %1893 = vmatmul.mubr.f32.gmra.mxu0 %v1744
        %v1894 = vpop.f32.mrf.mxu0
        %v1895 = vadd.f32 0.0, %v1894
        %v1896 = vpop.f32.mrf.mxu0
        %1897 = vdwg.mxu0
        %v1898 = vadd.f32 %v1686, %v1813
        %v1899 = vadd.f32 %v1687, %v1815
        %v1900 = vadd.f32 %v1688, %v1890
        %v1901 = vadd.f32 %v1689, %v1819
        %v1902 = vadd.f32 %v1690, %v1821
        %v1903 = vadd.f32 %v1691, %v1895
        %s1904 = scalar_lea.vmem [#allocation6], 128
        %v1905 = vld [vmem:[%s1904] sm:$0xff]
        %v1906 = vld [vmem:[%s1904 + $0x8] sm:$0xff]
        %1907 = vrot.lane.b32.xlu0 %v243, 90
        %v1908 = vpop.permute.xlu0 %1907
        %1909 = vrot.lane.b32.xlu0 %v244, 90
        %v1910 = vpop.permute.xlu0 %1909
        %1911 = vrot.lane.b32.xlu0 %v245, 90
        %v1912 = vpop.permute.xlu0 %1911
        %1913 = vrot.lane.b32.xlu0 %v246, 90
        %v1914 = vpop.permute.xlu0 %1913
        %1915 = vrot.lane.b32.xlu0 %v247, 90
        %v1916 = vpop.permute.xlu0 %1915
        %1917 = vrot.lane.b32.xlu0 %v248, 90
        %v1918 = vpop.permute.xlu0 %1917
        %1919 = vrot.lane.b32.xlu0 %v249, 90
        %v1920 = vpop.permute.xlu0 %1919
        %1921 = vrot.lane.b32.xlu0 %v250, 90
        %v1922 = vpop.permute.xlu0 %1921
        %1923 = vrot.lane.b32.xlu0 %v251, 90
        %v1924 = vpop.permute.xlu0 %1923
        %1925 = vrot.lane.b32.xlu0 %v252, 90
        %v1926 = vpop.permute.xlu0 %1925
        %1927 = vrot.lane.b32.xlu0 %v253, 90
        %v1928 = vpop.permute.xlu0 %1927
        %1929 = vrot.lane.b32.xlu0 %v254, 90
        %v1930 = vpop.permute.xlu0 %1929
        %vm1931 = vcmask 736256
        %v1932 = vsel %vm1931, %v1908, %v1910
        %v1933 = vsel %vm1931, %v1910, %v1912
        %v1934 = vsel %vm1931, %v1914, %v1916
        %v1935 = vsel %vm1931, %v1916, %v1918
        %v1936 = vsel %vm1931, %v1920, %v1922
        %v1937 = vsel %vm1931, %v1922, %v1924
        %v1938 = vsel %vm1931, %v1926, %v1928
        %v1939 = vsel %vm1931, %v1928, %v1930
        %v1953 = vsel %vm315, %v1905, 0
        %v1956 = vsel %vm315, %v1906, 0
        %1958 = vmatprep.subr.mxu0 0.0
        %1959 = vmatpush1.msra.mxu0 0.0
        %1960 = vmatprep.subr.mxu0 0.0
        %1961 = vmatpush1.msra.mxu0 0.0
        %1962 = vmatprep.subr.mxu0 0.0
        %1963 = vmatpush1.msra.mxu0 0.0
        %1964 = vmatprep.subr.mxu0 0.0
        %1965 = vmatpush1.msra.mxu0 0.0
        %1966 = vmatprep.subr.mxu0 0.0
        %1967 = vmatpush1.msra.mxu0 0.0
        %1968 = vmatprep.subr.mxu0 0.0
        %1969 = vmatpush1.msra.mxu0 0.0
        %1970 = vmatprep.subr.mxu0 0.0
        %1971 = vmatpush1.msra.mxu0 0.0
        %1972 = vmatprep.subr.mxu0 0.0
        %1973 = vmatpush1.msra.mxu0 0.0
        %1974 = vmatprep.subr.mxu0 0.0
        %1975 = vmatpush1.msra.mxu0 0.0
        %1976 = vmatprep.subr.mxu0 0.0
        %1977 = vmatpush1.msra.mxu0 0.0
        %1978 = vmatprep.subr.mxu0 0.0
        %1979 = vmatpush1.msra.mxu0 0.0
        %1980 = vmatprep.subr.mxu0 0.0
        %1981 = vmatpush1.msra.mxu0 0.0
        %1982 = vmatprep.subr.mxu0 %v1939
        %1983 = vmatpush1.msra.mxu0 %v1938
        %1984 = vmatprep.subr.mxu0 %v1937
        %1985 = vmatpush1.msra.mxu0 %v1936
        %1986 = vmatprep.subr.mxu0 %v1935
        %1987 = vmatpush1.msra.mxu0 %v1934
        %1988 = vmatprep.subr.mxu0 %v1933
        %1989 = vmatpush1.msra.mxu0 %v1932
        %1990 = vmatprep.subr.mxu0 0.0
        %1991 = vmatpush2.msra.mxu0 0.0
        %1992 = vmatprep.subr.mxu0 0.0
        %1993 = vmatpush2.msra.mxu0 0.0
        %1994 = vmatprep.subr.mxu0 0.0
        %1995 = vmatpush2.msra.mxu0 0.0
        %1996 = vmatprep.subr.mxu0 0.0
        %1997 = vmatpush2.msra.mxu0 0.0
        %1998 = vmatprep.subr.mxu0 0.0
        %1999 = vmatpush2.msra.mxu0 0.0
        %2000 = vmatprep.subr.mxu0 0.0
        %2001 = vmatpush2.msra.mxu0 0.0
        %2002 = vmatprep.subr.mxu0 0.0
        %2003 = vmatpush2.msra.mxu0 0.0
        %2004 = vmatprep.subr.mxu0 0.0
        %2005 = vmatpush2.msra.mxu0 0.0
        %2006 = vmatprep.subr.mxu0 0.0
        %2007 = vmatpush2.msra.mxu0 0.0
        %2008 = vmatprep.subr.mxu0 0.0
        %2009 = vmatpush2.msra.mxu0 0.0
        %2010 = vmatprep.subr.mxu0 0.0
        %2011 = vmatpush2.msra.mxu0 0.0
        %2012 = vmatprep.subr.mxu0 0.0
        %2013 = vmatpush2.msra.mxu0 0.0
        %2014 = vmatprep.subr.mxu0 0.0
        %2015 = vmatpush2.msra.mxu0 0.0
        %2016 = vmatprep.subr.mxu0 0.0
        %2017 = vmatpush2.msra.mxu0 0.0
        %2018 = vmatprep.subr.mxu0 0.0
        %2019 = vmatpush2.msra.mxu0 0.0
        %2020 = vmatprep.subr.mxu0 0.0
        %2021 = vmatpush2.msra.mxu0 0.0
        %2022 = vmatprep.mubr.f32.mxu0 0.0
        %2023 = vmatmul.mubr.f32.gmra.mxu0 %v1953
        %v2024 = vpop.f32.mrf.mxu0
        %v2025 = vadd.f32 0.0, %v2024
        %v2026 = vpop.f32.mrf.mxu0
        %v2027 = vadd.f32 0.0, %v2026
        %2028 = vmatprep.mubr.f32.mxu0 0.0
        %2029 = vmatmul.mubr.f32.gmra.mxu0 %v1956
        %v2030 = vpop.f32.mrf.mxu0
        %v2031 = vadd.f32 0.0, %v2030
        %v2032 = vpop.f32.mrf.mxu0
        %v2033 = vadd.f32 0.0, %v2032
        %2034 = vdwg.mxu0
        %2035 = vmatprep.subr.mxu0 0.0
        %2036 = vmatpush1.msra.mxu0 0.0
        %2037 = vmatprep.subr.mxu0 0.0
        %2038 = vmatpush1.msra.mxu0 0.0
        %2039 = vmatprep.subr.mxu0 0.0
        %2040 = vmatpush1.msra.mxu0 0.0
        %2041 = vmatprep.subr.mxu0 0.0
        %2042 = vmatpush1.msra.mxu0 0.0
        %2043 = vmatprep.subr.mxu0 0.0
        %2044 = vmatpush1.msra.mxu0 0.0
        %2045 = vmatprep.subr.mxu0 0.0
        %2046 = vmatpush1.msra.mxu0 0.0
        %2047 = vmatprep.subr.mxu0 0.0
        %2048 = vmatpush1.msra.mxu0 0.0
        %2049 = vmatprep.subr.mxu0 0.0
        %2050 = vmatpush1.msra.mxu0 0.0
        %2051 = vmatprep.subr.mxu0 0.0
        %2052 = vmatpush1.msra.mxu0 0.0
        %2053 = vmatprep.subr.mxu0 0.0
        %2054 = vmatpush1.msra.mxu0 0.0
        %2055 = vmatprep.subr.mxu0 0.0
        %2056 = vmatpush1.msra.mxu0 0.0
        %2057 = vmatprep.subr.mxu0 0.0
        %2058 = vmatpush1.msra.mxu0 0.0
        %2059 = vmatprep.subr.mxu0 0.0
        %2060 = vmatpush1.msra.mxu0 %v1930
        %2061 = vmatprep.subr.mxu0 0.0
        %2062 = vmatpush1.msra.mxu0 %v1924
        %2063 = vmatprep.subr.mxu0 0.0
        %2064 = vmatpush1.msra.mxu0 %v1918
        %2065 = vmatprep.subr.mxu0 0.0
        %2066 = vmatpush1.msra.mxu0 %v1912
        %2067 = vmatprep.subr.mxu0 0.0
        %2068 = vmatpush2.msra.mxu0 0.0
        %2069 = vmatprep.subr.mxu0 0.0
        %2070 = vmatpush2.msra.mxu0 0.0
        %2071 = vmatprep.subr.mxu0 0.0
        %2072 = vmatpush2.msra.mxu0 0.0
        %2073 = vmatprep.subr.mxu0 0.0
        %2074 = vmatpush2.msra.mxu0 0.0
        %2075 = vmatprep.subr.mxu0 0.0
        %2076 = vmatpush2.msra.mxu0 0.0
        %2077 = vmatprep.subr.mxu0 0.0
        %2078 = vmatpush2.msra.mxu0 0.0
        %2079 = vmatprep.subr.mxu0 0.0
        %2080 = vmatpush2.msra.mxu0 0.0
        %2081 = vmatprep.subr.mxu0 0.0
        %2082 = vmatpush2.msra.mxu0 0.0
        %2083 = vmatprep.subr.mxu0 0.0
        %2084 = vmatpush2.msra.mxu0 0.0
        %2085 = vmatprep.subr.mxu0 0.0
        %2086 = vmatpush2.msra.mxu0 0.0
        %2087 = vmatprep.subr.mxu0 0.0
        %2088 = vmatpush2.msra.mxu0 0.0
        %2089 = vmatprep.subr.mxu0 0.0
        %2090 = vmatpush2.msra.mxu0 0.0
        %2091 = vmatprep.subr.mxu0 0.0
        %2092 = vmatpush2.msra.mxu0 0.0
        %2093 = vmatprep.subr.mxu0 0.0
        %2094 = vmatpush2.msra.mxu0 0.0
        %2095 = vmatprep.subr.mxu0 0.0
        %2096 = vmatpush2.msra.mxu0 0.0
        %2097 = vmatprep.subr.mxu0 0.0
        %2098 = vmatpush2.msra.mxu0 0.0
        %2099 = vmatprep.mubr.f32.mxu0 0.0
        %2100 = vmatmul.mubr.f32.gmra.mxu0 %v1953
        %v2101 = vpop.f32.mrf.mxu0
        %v2102 = vadd.f32 0.0, %v2101
        %v2103 = vpop.f32.mrf.mxu0
        %2104 = vmatprep.mubr.f32.mxu0 0.0
        %2105 = vmatmul.mubr.f32.gmra.mxu0 %v1956
        %v2106 = vpop.f32.mrf.mxu0
        %v2107 = vadd.f32 0.0, %v2106
        %v2108 = vpop.f32.mrf.mxu0
        %2109 = vdwg.mxu0
        %v2110 = vadd.f32 %v1898, %v2025
        %v2111 = vadd.f32 %v1899, %v2027
        %v2112 = vadd.f32 %v1900, %v2102
        %v2113 = vadd.f32 %v1901, %v2031
        %v2114 = vadd.f32 %v1902, %v2033
        %v2115 = vadd.f32 %v1903, %v2107
        %v2116 = vmax.f32 %v2110, 0.0
        %v2117 = vmax.f32 %v2111, 0.0
        %v2118 = vmax.f32 %v2112, 0.0
        %v2119 = vmax.f32 %v2113, 0.0
        %v2120 = vmax.f32 %v2114, 0.0
        %v2121 = vmax.f32 %v2115, 0.0
        %v2122 = vld [vmem:[%s2] sm:$0xff]
        %v2123 = vld [vmem:[%s2 + $0x8] sm:$0xff]
        %v2124 = vld [vmem:[%s2 + $0x10] sm:$0xff]
        %v2125 = vld [vmem:[%s2 + $0x18] sm:$0xff]
        %v2126 = vld [vmem:[%s177] sm:$0xff]
        %v2127 = vld [vmem:[%s177 + $0x8] sm:$0xff]
        %v2128 = vld [vmem:[%s177 + $0x10] sm:$0xff]
        %v2129 = vld [vmem:[%s177 + $0x18] sm:$0xff]
        %v2130 = vld [vmem:[%s177 + $0x20] sm:$0xff]
        %v2131 = vld [vmem:[%s177 + $0x28] sm:$0xff]
        %v2132 = vld [vmem:[%s177 + $0x30] sm:$0xff]
        %v2133 = vld [vmem:[%s177 + $0x38] sm:$0xff]
        %v2134 = vld [vmem:[%s177 + $0x40] sm:$0xff]
        %v2135 = vld [vmem:[%s177 + $0x48] sm:$0xff]
        %v2136 = vld [vmem:[%s177 + $0x50] sm:$0xff]
        %v2137 = vld [vmem:[%s177 + $0x58] sm:$0xff]
        %2150 = vrot.lane.b32.xlu0 %v2126, 109
        %v2151 = vpop.permute.xlu0 %2150
        %2152 = vrot.lane.b32.xlu0 %v2127, 109
        %v2153 = vpop.permute.xlu0 %2152
        %2154 = vrot.lane.b32.xlu0 %v2128, 109
        %v2155 = vpop.permute.xlu0 %2154
        %2156 = vrot.lane.b32.xlu0 %v2129, 109
        %v2157 = vpop.permute.xlu0 %2156
        %2158 = vrot.lane.b32.xlu0 %v2130, 109
        %v2159 = vpop.permute.xlu0 %2158
        %2160 = vrot.lane.b32.xlu0 %v2131, 109
        %v2161 = vpop.permute.xlu0 %2160
        %2162 = vrot.lane.b32.xlu0 %v2132, 109
        %v2163 = vpop.permute.xlu0 %2162
        %2164 = vrot.lane.b32.xlu0 %v2133, 109
        %v2165 = vpop.permute.xlu0 %2164
        %2166 = vrot.lane.b32.xlu0 %v2134, 109
        %v2167 = vpop.permute.xlu0 %2166
        %2168 = vrot.lane.b32.xlu0 %v2135, 109
        %v2169 = vpop.permute.xlu0 %2168
        %2170 = vrot.lane.b32.xlu0 %v2136, 109
        %v2171 = vpop.permute.xlu0 %2170
        %2172 = vrot.lane.b32.xlu0 %v2137, 109
        %v2173 = vpop.permute.xlu0 %2172
        %v2174 = vsel %vm1083, %v2151, %v2153
        %v2175 = vsel %vm1083, %v2153, %v2155
        %v2176 = vsel %vm1083, %v2157, %v2159
        %v2177 = vsel %vm1083, %v2159, %v2161
        %v2178 = vsel %vm1083, %v2163, %v2165
        %v2179 = vsel %vm1083, %v2165, %v2167
        %v2180 = vsel %vm1083, %v2169, %v2171
        %v2181 = vsel %vm1083, %v2171, %v2173
        %vm2194 = vcmask 130048
        %v2196 = vsel %vm2194, %v2122, 0
        %v2199 = vsel %vm2194, %v2123, 0
        %v2202 = vsel %vm2194, %v2124, 0
        %v2205 = vsel %vm2194, %v2125, 0
        %2207 = vmatprep.subr.mxu0 0.0
        %2208 = vmatpush1.msra.mxu0 0.0
        %2209 = vmatprep.subr.mxu0 0.0
        %2210 = vmatpush1.msra.mxu0 0.0
        %2211 = vmatprep.subr.mxu0 0.0
        %2212 = vmatpush1.msra.mxu0 0.0
        %2213 = vmatprep.subr.mxu0 0.0
        %2214 = vmatpush1.msra.mxu0 0.0
        %2215 = vmatprep.subr.mxu0 0.0
        %2216 = vmatpush1.msra.mxu0 0.0
        %2217 = vmatprep.subr.mxu0 0.0
        %2218 = vmatpush1.msra.mxu0 0.0
        %2219 = vmatprep.subr.mxu0 0.0
        %2220 = vmatpush1.msra.mxu0 0.0
        %2221 = vmatprep.subr.mxu0 0.0
        %2222 = vmatpush1.msra.mxu0 0.0
        %2223 = vmatprep.subr.mxu0 0.0
        %2224 = vmatpush1.msra.mxu0 0.0
        %2225 = vmatprep.subr.mxu0 0.0
        %2226 = vmatpush1.msra.mxu0 0.0
        %2227 = vmatprep.subr.mxu0 0.0
        %2228 = vmatpush1.msra.mxu0 0.0
        %2229 = vmatprep.subr.mxu0 0.0
        %2230 = vmatpush1.msra.mxu0 0.0
        %2231 = vmatprep.subr.mxu0 0.0
        %2232 = vmatpush1.msra.mxu0 0.0
        %2233 = vmatprep.subr.mxu0 0.0
        %2234 = vmatpush1.msra.mxu0 0.0
        %2235 = vmatprep.subr.mxu0 %v2120
        %2236 = vmatpush1.msra.mxu0 %v2119
        %2237 = vmatprep.subr.mxu0 %v2117
        %2238 = vmatpush1.msra.mxu0 %v2116
        %2239 = vmatprep.subr.mxu0 0.0
        %2240 = vmatpush2.msra.mxu0 0.0
        %2241 = vmatprep.subr.mxu0 0.0
        %2242 = vmatpush2.msra.mxu0 0.0
        %2243 = vmatprep.subr.mxu0 0.0
        %2244 = vmatpush2.msra.mxu0 0.0
        %2245 = vmatprep.subr.mxu0 0.0
        %2246 = vmatpush2.msra.mxu0 0.0
        %2247 = vmatprep.subr.mxu0 0.0
        %2248 = vmatpush2.msra.mxu0 0.0
        %2249 = vmatprep.subr.mxu0 0.0
        %2250 = vmatpush2.msra.mxu0 0.0
        %2251 = vmatprep.subr.mxu0 0.0
        %2252 = vmatpush2.msra.mxu0 0.0
        %2253 = vmatprep.subr.mxu0 0.0
        %2254 = vmatpush2.msra.mxu0 0.0
        %2255 = vmatprep.subr.mxu0 0.0
        %2256 = vmatpush2.msra.mxu0 0.0
        %2257 = vmatprep.subr.mxu0 0.0
        %2258 = vmatpush2.msra.mxu0 0.0
        %2259 = vmatprep.subr.mxu0 0.0
        %2260 = vmatpush2.msra.mxu0 0.0
        %2261 = vmatprep.subr.mxu0 0.0
        %2262 = vmatpush2.msra.mxu0 0.0
        %2263 = vmatprep.subr.mxu0 0.0
        %2264 = vmatpush2.msra.mxu0 0.0
        %2265 = vmatprep.subr.mxu0 0.0
        %2266 = vmatpush2.msra.mxu0 0.0
        %2267 = vmatprep.subr.mxu0 0.0
        %2268 = vmatpush2.msra.mxu0 0.0
        %2269 = vmatprep.subr.mxu0 0.0
        %2270 = vmatpush2.msra.mxu0 0.0
        %2271 = vmatprep.mubr.f32.mxu0 0.0
        %2272 = vmatmul.mubr.f32.gmra.mxu0 %v2196
        %v2273 = vpop.f32.mrf.mxu0
        %v2274 = vadd.f32 %v2174, %v2273
        %v2275 = vpop.f32.mrf.mxu0
        %v2276 = vadd.f32 %v2175, %v2275
        %2277 = vmatprep.mubr.f32.mxu0 0.0
        %2278 = vmatmul.mubr.f32.gmra.mxu0 %v2199
        %v2279 = vpop.f32.mrf.mxu0
        %v2280 = vadd.f32 %v2176, %v2279
        %v2281 = vpop.f32.mrf.mxu0
        %v2282 = vadd.f32 %v2177, %v2281
        %2283 = vmatprep.mubr.f32.mxu0 0.0
        %2284 = vmatmul.mubr.f32.gmra.mxu0 %v2202
        %v2285 = vpop.f32.mrf.mxu0
        %v2286 = vadd.f32 %v2178, %v2285
        %v2287 = vpop.f32.mrf.mxu0
        %v2288 = vadd.f32 %v2179, %v2287
        %2289 = vmatprep.mubr.f32.mxu0 0.0
        %2290 = vmatmul.mubr.f32.gmra.mxu0 %v2205
        %v2291 = vpop.f32.mrf.mxu0
        %v2292 = vadd.f32 %v2180, %v2291
        %v2293 = vpop.f32.mrf.mxu0
        %v2294 = vadd.f32 %v2181, %v2293
        %2295 = vdwg.mxu0
        %2296 = vmatprep.subr.mxu0 0.0
        %2297 = vmatpush1.msra.mxu0 0.0
        %2298 = vmatprep.subr.mxu0 0.0
        %2299 = vmatpush1.msra.mxu0 0.0
        %2300 = vmatprep.subr.mxu0 0.0
        %2301 = vmatpush1.msra.mxu0 0.0
        %2302 = vmatprep.subr.mxu0 0.0
        %2303 = vmatpush1.msra.mxu0 0.0
        %2304 = vmatprep.subr.mxu0 0.0
        %2305 = vmatpush1.msra.mxu0 0.0
        %2306 = vmatprep.subr.mxu0 0.0
        %2307 = vmatpush1.msra.mxu0 0.0
        %2308 = vmatprep.subr.mxu0 0.0
        %2309 = vmatpush1.msra.mxu0 0.0
        %2310 = vmatprep.subr.mxu0 0.0
        %2311 = vmatpush1.msra.mxu0 0.0
        %2312 = vmatprep.subr.mxu0 0.0
        %2313 = vmatpush1.msra.mxu0 0.0
        %2314 = vmatprep.subr.mxu0 0.0
        %2315 = vmatpush1.msra.mxu0 0.0
        %2316 = vmatprep.subr.mxu0 0.0
        %2317 = vmatpush1.msra.mxu0 0.0
        %2318 = vmatprep.subr.mxu0 0.0
        %2319 = vmatpush1.msra.mxu0 0.0
        %2320 = vmatprep.subr.mxu0 0.0
        %2321 = vmatpush1.msra.mxu0 0.0
        %2322 = vmatprep.subr.mxu0 0.0
        %2323 = vmatpush1.msra.mxu0 0.0
        %2324 = vmatprep.subr.mxu0 0.0
        %2325 = vmatpush1.msra.mxu0 %v2121
        %2326 = vmatprep.subr.mxu0 0.0
        %2327 = vmatpush1.msra.mxu0 %v2118
        %2328 = vmatprep.subr.mxu0 0.0
        %2329 = vmatpush2.msra.mxu0 0.0
        %2330 = vmatprep.subr.mxu0 0.0
        %2331 = vmatpush2.msra.mxu0 0.0
        %2332 = vmatprep.subr.mxu0 0.0
        %2333 = vmatpush2.msra.mxu0 0.0
        %2334 = vmatprep.subr.mxu0 0.0
        %2335 = vmatpush2.msra.mxu0 0.0
        %2336 = vmatprep.subr.mxu0 0.0
        %2337 = vmatpush2.msra.mxu0 0.0
        %2338 = vmatprep.subr.mxu0 0.0
        %2339 = vmatpush2.msra.mxu0 0.0
        %2340 = vmatprep.subr.mxu0 0.0
        %2341 = vmatpush2.msra.mxu0 0.0
        %2342 = vmatprep.subr.mxu0 0.0
        %2343 = vmatpush2.msra.mxu0 0.0
        %2344 = vmatprep.subr.mxu0 0.0
        %2345 = vmatpush2.msra.mxu0 0.0
        %2346 = vmatprep.subr.mxu0 0.0
        %2347 = vmatpush2.msra.mxu0 0.0
        %2348 = vmatprep.subr.mxu0 0.0
        %2349 = vmatpush2.msra.mxu0 0.0
        %2350 = vmatprep.subr.mxu0 0.0
        %2351 = vmatpush2.msra.mxu0 0.0
        %2352 = vmatprep.subr.mxu0 0.0
        %2353 = vmatpush2.msra.mxu0 0.0
        %2354 = vmatprep.subr.mxu0 0.0
        %2355 = vmatpush2.msra.mxu0 0.0
        %2356 = vmatprep.subr.mxu0 0.0
        %2357 = vmatpush2.msra.mxu0 0.0
        %2358 = vmatprep.subr.mxu0 0.0
        %2359 = vmatpush2.msra.mxu0 0.0
        %2360 = vmatprep.mubr.f32.mxu0 0.0
        %2361 = vmatmul.mubr.f32.gmra.mxu0 %v2196
        %v2362 = vpop.f32.mrf.mxu0
        %v2363 = vadd.f32 %v2155, %v2362
        %v2364 = vpop.f32.mrf.mxu0
        %2365 = vmatprep.mubr.f32.mxu0 0.0
        %2366 = vmatmul.mubr.f32.gmra.mxu0 %v2199
        %v2367 = vpop.f32.mrf.mxu0
        %v2368 = vadd.f32 %v2161, %v2367
        %v2369 = vpop.f32.mrf.mxu0
        %2370 = vmatprep.mubr.f32.mxu0 0.0
        %2371 = vmatmul.mubr.f32.gmra.mxu0 %v2202
        %v2372 = vpop.f32.mrf.mxu0
        %v2373 = vadd.f32 %v2167, %v2372
        %v2374 = vpop.f32.mrf.mxu0
        %2375 = vmatprep.mubr.f32.mxu0 0.0
        %2376 = vmatmul.mubr.f32.gmra.mxu0 %v2205
        %v2377 = vpop.f32.mrf.mxu0
        %v2378 = vadd.f32 %v2173, %v2377
        %v2379 = vpop.f32.mrf.mxu0
        %2380 = vdwg.mxu0
        %2381 = vst [vmem:[%s203] sm:$0xff] %v2274
        %2382 = vst [vmem:[%s203 + $0x8] sm:$0xff] %v2276
        %2383 = vst.msk [vmem:[%s203 + $0x10] sm:$0xff] %vm315, %v2363
        %2384 = vst [vmem:[%s203 + $0x18] sm:$0xff] %v2280
        %2385 = vst [vmem:[%s203 + $0x20] sm:$0xff] %v2282
        %2386 = vst.msk [vmem:[%s203 + $0x28] sm:$0xff] %vm315, %v2368
        %2387 = vst [vmem:[%s203 + $0x30] sm:$0xff] %v2286
        %2388 = vst [vmem:[%s203 + $0x38] sm:$0xff] %v2288
        %2389 = vst.msk [vmem:[%s203 + $0x40] sm:$0xff] %vm315, %v2373
        %2390 = vst [vmem:[%s203 + $0x48] sm:$0xff] %v2292
        %2391 = vst [vmem:[%s203 + $0x50] sm:$0xff] %v2294
        %2392 = vst.msk [vmem:[%s203 + $0x58] sm:$0xff] %vm315, %v2378
        %s2393 = sand.u32 %s97, 1
        %s2394 = scalar_lea.sflag [#allocation5], %s2393
        %s2395 = sand.u32 %s97, 1
        %s2396 = smul.addr %s2395, 96
        %s2397 = scalar_lea.vmem [#allocation8], %s2396
        // Predicated region
        $region41: #{tpu_custom_call.1} parent=31 // pred_check
          %p2398 = pneg %p107
        $region42: #{tpu_custom_call.1} parent=31 // pred_check_branch
          %2400 = sbr.rel (%p2398) target = $region44
        $region43: #{tpu_custom_call.1} parent=31 // pred_region
          %s2402 = ssub.s32 1536, 1536
          %2403 = vsyncadd %s2394, %s2402
          %s2404 = smul.addr %s21, 12
          %s2405 = smul.addr %s2404, 128
          %s2406 = scalar_lea.hbm %s3, %s2405
          %s2407 = sshll.u32 %s2397, 4
          %s2408 = int_to_ptr.vmem [resolvable:$true] %s2407
          %2413 = dma.vmem_to_hbm [thread:$0]  %s2408, 1536, %s2406, %s2394, 384, 384, 24
        $region44: #{tpu_custom_call.1} parent=31 // pred_fallthru
          _
      $region32: #{tpu_custom_call.1} parent=5 // pred_fallthru
        _
      %p2414 = scmp.le.s32.totalorder 2, %s16
      // Predicated region
      $region45: #{tpu_custom_call.1} parent=5 // pred_check
        %p2415 = pneg %p2414
      $region46: #{tpu_custom_call.1} parent=5 // pred_check_branch
        %2417 = sbr.rel (%p2415) target = $region48
      $region47: #{tpu_custom_call.1} parent=5 // pred_region
        %s2418 = ssub.s32 %s16, 2
        // Predicated region
        $region49: #{tpu_custom_call.1} parent=47 // pred_check
          %p2419 = pneg %p113
        $region50: #{tpu_custom_call.1} parent=47 // pred_check_branch
          %2421 = sbr.rel (%p2419) target = $region52
        $region51: #{tpu_custom_call.1} parent=47 // pred_region
          %s2422 = sand.u32 %s98, 1
          %s2423 = scalar_lea.sflag [#allocation5], %s2422
          %s2424 = sand.u32 %s98, 1
          %s2425 = smul.addr %s2424, 96
          %s2426 = scalar_lea.vmem [#allocation8], %s2425
          %2427 = dma.done %s2423, 1536
        $region52: #{tpu_custom_call.1} parent=47 // pred_fallthru
          _
      $region48: #{tpu_custom_call.1} parent=5 // pred_fallthru
        _
    $region6: #{tpu_custom_call.1} parent=1 // loop_footer
      %s20 = sadd.s32 1, %s16
    $region7: #{tpu_custom_call.1} parent=1 // loop_footer_branch
      %15 = sbr.rel target = $region3
    $region8: #{tpu_custom_call.1} parent=1 // loop_exit
      _
    %2428 = vsyncpa [#allocation4], 1
    %s2429 = scalar_lea.sflag [#allocation4], 1
    %2430 = vsyncpa %s2429, 1
    %2431 = vsyncpa [#allocation7], 1
    %2432 = vsyncpa [#allocation5], 1
    %s2433 = scalar_lea.sflag [#allocation5], 1
    %2434 = vsyncpa %s2433, 1

</llo_original>
